<compile_context>
chip_gen: v6e
topology: v6e:2x2x1
jax: 0.10.0
libtpu: 0.0.40
codegen_flags: <defaults>
</compile_context>

<pallas_src>
import functools

import jax
import jax.numpy as jnp
from jax.experimental import pallas as pl
from jax.experimental.pallas import tpu as pltpu

_EPS = 1e-5
_LANE = 128


def _round_up(x, m):
    return (x + m - 1) // m * m


def _pick_tile_h(ho, cap=8):
    """Largest divisor of Ho <= cap (production code would derive cap from the VMEM budget)."""
    for d in range(min(ho, cap), 0, -1):
        if ho % d == 0:
            return d
    return 1


def _vmem_limit_bytes(tih, wp2, cp, tile_h, wo, coutp):
    x_tile = tih * wp2 * cp * 4
    z_tile = tile_h * wo * coutp * 2
    work = tile_h * wo * (cp * 4 + cp * 2 + coutp * 4)          # dw acc f32 + y bf16 + z f32
    params = 9 * cp * 4 + cp * coutp * 2 + 4 * (cp + coutp) * 4
    need = 2 * (x_tile + z_tile) + work + params + (1 << 20)    # double-buffered I/O + slack
    return int(min(max(2 * need, 8 << 20), 64 << 20))           # v7x physical VMEM = 64 MiB


def _depthwise_acc(xt_ref, wdw, *, stride, tile_h, wo):
    """3x3 depthwise conv on one halo'd input tile -> (tile_h, wo, Cp) f32."""
    cp = wdw.shape[-1]
    acc = jnp.zeros((tile_h, wo, cp), jnp.float32)
    if stride == 1:
        for kh in range(3):
            for kw in range(3):
                patch = xt_ref[pl.ds(kh, tile_h), pl.ds(kw, wo), :]   # zero-cost ref view
                acc = acc + patch * wdw[kh * 3 + kw][None, None, :]
    else:
        # TODO(synk): strided (stride>1) path loads the tile once and strided-slices in
        # registers; not exercised by the stride=1 test below.
        x = xt_ref[...]
        for kh in range(3):
            for kw in range(3):
                patch = jax.lax.slice(
                    x, (kh, kw, 0),
                    (kh + (tile_h - 1) * stride + 1, kw + (wo - 1) * stride + 1, cp),
                    (stride, stride, 1))
                acc = acc + patch * wdw[kh * 3 + kw][None, None, :]
    return acc


# ------------------------------ pass 1: depthwise + BN1 partial stats ------------------------------
def _dw_stats_kernel(xt_ref, wdw_ref, st1_ref, *, stride, tile_h, wo):
    acc = _depthwise_acc(xt_ref, wdw_ref[...], stride=stride, tile_h=tile_h, wo=wo)
    am = acc.reshape(tile_h * wo, -1)
    st1_ref[...] = jnp.concatenate(
        [jnp.sum(am, axis=0, keepdims=True),
         jnp.sum(am * am, axis=0, keepdims=True)], axis=0)


# --------------------- pass 2: depthwise + BN1 + ReLU + 1x1 matmul + BN2 partial stats ---------------------
def _pointwise_kernel(xt_ref, wdw_ref, sc1_ref, sh1_ref, wpw_ref, z_ref, st2_ref,
                      *, stride, tile_h, wo):
    acc = _depthwise_acc(xt_ref, wdw_ref[...], stride=stride, tile_h=tile_h, wo=wo)
    sc1 = sc1_ref[...].reshape(1, 1, -1)
    sh1 = sh1_ref[...].reshape(1, 1, -1)
    y = jnp.maximum(acc * sc1 + sh1, 0.0).astype(jnp.bfloat16)       # BN1 + ReLU, bf16 operand
    ym = y.reshape(tile_h * wo, -1)
    z = jnp.dot(ym, wpw_ref[...], preferred_element_type=jnp.float32)  # MXU, f32 accumulate
    st2_ref[...] = jnp.concatenate(
        [jnp.sum(z, axis=0, keepdims=True),
         jnp.sum(z * z, axis=0, keepdims=True)], axis=0)
    z_ref[...] = z.reshape(tile_h, wo, -1).astype(z_ref.dtype)


# ------------------------------------ pass 3: BN2 + ReLU ------------------------------------
def _bn_relu_kernel(z_ref, sc2_ref, sh2_ref, out_ref):
    sc2 = sc2_ref[...].reshape(1, 1, -1)
    sh2 = sh2_ref[...].reshape(1, 1, -1)
    out_ref[...] = jnp.maximum(z_ref[...].astype(jnp.float32) * sc2 + sh2, 0.0)


def mobilenet_block(x_nchw, w_dw, g1, b1, w_pw, g2, b2, *, stride=1):
    """x_nchw: (N,Cin,H,W); w_dw: (Cin,1,3,3); w_pw: (Cout,Cin,1,1). Returns NCHW."""
    N, Cin, H, W = x_nchw.shape
    Cout = w_pw.shape[0]
    Ho = (H + 2 - 3) // stride + 1
    Wo = (W + 2 - 3) // stride + 1
    Cp = _round_up(Cin, _LANE)
    Coutp = _round_up(Cout, _LANE)
    Wp2 = W + 2

    # NHWC, spatial zero-pad (padding=1), channel zero-pad to a lane-dense multiple of 128.
    x = jnp.transpose(x_nchw, (0, 2, 3, 1)).astype(jnp.float32)
    x = jnp.pad(x, ((0, 0), (1, 1), (1, 1), (0, Cp - Cin)))

    # H tiling; halo rows are duplicated once here so BlockSpec blocks are disjoint.
    tile_h = _pick_tile_h(Ho)
    T = Ho // tile_h
    tih = (tile_h - 1) * stride + 3
    x_tiles = jnp.stack(
        [x[:, t * tile_h * stride: t * tile_h * stride + tih] for t in range(T)],
        axis=1)                                                   # (N, T, tih, W+2, Cp)

    # Parameters, zero-padded on the channel axes (padded channels stay exactly 0 end-to-end).
    wdw_p = jnp.zeros((9, Cp), jnp.float32).at[:, :Cin].set(
        jnp.transpose(w_dw[:, 0], (1, 2, 0)).reshape(9, Cin))
    wpw_p = jnp.zeros((Cp, Coutp), jnp.float32).at[:Cin, :Cout].set(
        jnp.transpose(w_pw[:, :, 0, 0], (1, 0))).astype(jnp.bfloat16)
    g1p = jnp.zeros((Cp,), jnp.float32).at[:Cin].set(g1)
    b1p = jnp.zeros((Cp,), jnp.float32).at[:Cin].set(b1)
    g2p = jnp.zeros((Coutp,), jnp.float32).at[:Cout].set(g2)
    b2p = jnp.zeros((Coutp,), jnp.float32).at[:Cout].set(b2)

    grid = (N, T)
    cparams = pltpu.CompilerParams(
        dimension_semantics=("parallel", "parallel"),
        vmem_limit_bytes=_vmem_limit_bytes(tih, Wp2, Cp, tile_h, Wo, Coutp))

    xt_spec = pl.BlockSpec((None, None, tih, Wp2, Cp), lambda n, t: (n, t, 0, 0, 0))
    wdw_spec = pl.BlockSpec((9, Cp), lambda n, t: (0, 0))
    wpw_spec = pl.BlockSpec((Cp, Coutp), lambda n, t: (0, 0))
    vec_cp = pl.BlockSpec((1, Cp), lambda n, t: (0, 0))
    vec_co = pl.BlockSpec((1, Coutp), lambda n, t: (0, 0))
    st1_spec = pl.BlockSpec((None, None, 2, Cp), lambda n, t: (n, t, 0, 0))
    st2_spec = pl.BlockSpec((None, None, 2, Coutp), lambda n, t: (n, t, 0, 0))
    z_spec = pl.BlockSpec((None, tile_h, Wo, Coutp), lambda n, t: (n, t, 0, 0))

    count = float(N * Ho * Wo)
    dw_flops = 2 * 9 * N * Ho * Wo * Cp
    pw_flops = 2 * N * Ho * Wo * Cp * Coutp

    # -------- pass 1: BN1 statistics --------
    stats1 = pl.pallas_call(
        functools.partial(_dw_stats_kernel, stride=stride, tile_h=tile_h, wo=Wo),
        grid=grid,
        in_specs=[xt_spec, wdw_spec],
        out_specs=st1_spec,
        out_shape=jax.ShapeDtypeStruct((N, T, 2, Cp), jnp.float32),
        compiler_params=cparams,
        cost_estimate=pl.CostEstimate(flops=dw_flops, transcendentals=0,
                                      bytes_accessed=x_tiles.size * 4 + N * T * 2 * Cp * 4),
    )(x_tiles, wdw_p)

    s1 = jnp.sum(stats1, axis=(0, 1))                       # tiny cross-tile reduction
    mean1 = s1[0] / count
    var1 = jnp.maximum(s1[1] / count - mean1 * mean1, 0.0)
    scale1 = (g1p * jax.lax.rsqrt(var1 + _EPS)).reshape(1, Cp)
    shift1 = (b1p - mean1 * scale1[0]).reshape(1, Cp)

    # -------- pass 2: BN1 + ReLU + pointwise matmul + BN2 statistics --------
    z, stats2 = pl.pallas_call(
        functools.partial(_pointwise_kernel, stride=stride, tile_h=tile_h, wo=Wo),
        grid=grid,
        in_specs=[xt_spec, wdw_spec, vec_cp, vec_cp, wpw_spec],
        out_specs=(z_spec, st2_spec),
        out_shape=(jax.ShapeDtypeStruct((N, Ho, Wo, Coutp), jnp.bfloat16),
                   jax.ShapeDtypeStruct((N, T, 2, Coutp), jnp.float32)),
        compiler_params=cparams,
        cost_estimate=pl.CostEstimate(
            flops=pw_flops + dw_flops, transcendentals=0,
            bytes_accessed=x_tiles.size * 4 + Cp * Coutp * 2 + N * Ho * Wo * Coutp * 2),
    )(x_tiles, wdw_p, scale1, shift1, wpw_p)

    s2 = jnp.sum(stats2, axis=(0, 1))
    mean2 = s2[0] / count
    var2 = jnp.maximum(s2[1] / count - mean2 * mean2, 0.0)
    scale2 = (g2p * jax.lax.rsqrt(var2 + _EPS)).reshape(1, Coutp)
    shift2 = (b2p - mean2 * scale2[0]).reshape(1, Coutp)

    # -------- pass 3: BN2 + ReLU --------
    out_p = pl.pallas_call(
        _bn_relu_kernel,
        grid=grid,
        in_specs=[z_spec, vec_co, vec_co],
        out_specs=z_spec,
        out_shape=jax.ShapeDtypeStruct((N, Ho, Wo, Coutp), jnp.float32),
        compiler_params=cparams,
        cost_estimate=pl.CostEstimate(flops=2 * N * Ho * Wo * Coutp, transcendentals=0,
                                      bytes_accessed=N * Ho * Wo * Coutp * 6),
    )(z, scale2, shift2)

    # Drop channel padding; return NCHW to match the PyTorch module interface.
    return jnp.transpose(out_p[..., :Cout], (0, 3, 1, 2))


def _block_reference(x, w_dw, g1, b1, w_pw, g2, b2, *, stride=1):
    """Pure-JAX reference matching the PyTorch module (NCHW, f32)."""
    y = jax.lax.conv_general_dilated(
        x, w_dw, window_strides=(stride, stride), padding=((1, 1), (1, 1)),
        dimension_numbers=("NCHW", "OIHW", "NCHW"),
        feature_group_count=x.shape[1])
    m = y.mean(axis=(0, 2, 3), keepdims=True)
    v = ((y - m) ** 2).mean(axis=(0, 2, 3), keepdims=True)
    y = (y - m) * jax.lax.rsqrt(v + _EPS) * g1.reshape(1, -1, 1, 1) + b1.reshape(1, -1, 1, 1)
    y = jnp.maximum(y, 0.0)
    y = jax.lax.conv_general_dilated(
        y, w_pw, window_strides=(1, 1), padding="VALID",
        dimension_numbers=("NCHW", "OIHW", "NCHW"))
    m = y.mean(axis=(0, 2, 3), keepdims=True)
    v = ((y - m) ** 2).mean(axis=(0, 2, 3), keepdims=True)
    y = (y - m) * jax.lax.rsqrt(v + _EPS) * g2.reshape(1, -1, 1, 1) + b2.reshape(1, -1, 1, 1)
    return jnp.maximum(y, 0.0)


if __name__ == "__main__":
    key = jax.random.PRNGKey(0)
    k_x, k_dw, k_pw, k_g1, k_b1, k_g2, k_b2 = jax.random.split(key, 7)

    N, Cin, H, W = 2, 4, 16, 16
    Cout, stride = 8, 1

    x = jax.random.normal(k_x, (N, Cin, H, W), jnp.float32)
    w_dw = 0.3 * jax.random.normal(k_dw, (Cin, 1, 3, 3), jnp.float32)     # conv1 weight
    w_pw = 0.3 * jax.random.normal(k_pw, (Cout, Cin, 1, 1), jnp.float32)  # conv2 weight
    g1 = 1.0 + 0.1 * jax.random.normal(k_g1, (Cin,), jnp.float32)         # bn1 weight
    b1 = 0.1 * jax.random.normal(k_b1, (Cin,), jnp.float32)               # bn1 bias
    g2 = 1.0 + 0.1 * jax.random.normal(k_g2, (Cout,), jnp.float32)        # bn2 weight
    b2 = 0.1 * jax.random.normal(k_b2, (Cout,), jnp.float32)              # bn2 bias

    fn = jax.jit(functools.partial(mobilenet_block, stride=stride))
    out = jax.block_until_ready(fn(x, w_dw, g1, b1, w_pw, g2, b2))

    ref = _block_reference(x, w_dw, g1, b1, w_pw, g2, b2, stride=stride)
    assert out.shape == ref.shape == (N, Cout, H // stride, W // stride)
    # bf16 matmul operands (f32 accumulate) -> slightly relaxed tolerance vs the f32 reference.
    max_err = float(jnp.max(jnp.abs(out - ref)))
    assert jnp.allclose(out, ref, atol=2e-2, rtol=2e-2), f"mismatch, max abs err={max_err}"

    print("KERNEL_OK")
</pallas_src>

<mosaic_0001>
module attributes {stable_mosaic.version = 11 : i64} {
  func.func @_bn_relu_kernel(%arg0: i32, %arg1: i32, %arg2: memref<1x8x16x128xbf16, #tpu.memory_space<vmem>>, %arg3: memref<1x128xf32, #tpu.memory_space<vmem>>, %arg4: memref<1x128xf32, #tpu.memory_space<vmem>>, %arg5: memref<1x8x16x128xf32, #tpu.memory_space<vmem>>) attributes {dimension_semantics = [#tpu.dimension_semantics<parallel>, #tpu.dimension_semantics<parallel>], iteration_bounds = array<i64: 2, 2>, scalar_prefetch = 0 : i64, scratch_operands = 0 : i64, tpu.core_type = #tpu.core_type<tc>, window_params = [{transform_indices = @transform_0, window_bounds = array<i64: 1, 8, 16, 128>}, {pipeline_mode = #tpu.pipeline_mode<synchronous>, transform_indices = @transform_1, window_bounds = array<i64: 1, 128>}, {pipeline_mode = #tpu.pipeline_mode<synchronous>, transform_indices = @transform_2, window_bounds = array<i64: 1, 128>}, {transform_indices = @transform_3, window_bounds = array<i64: 1, 8, 16, 128>}]} {
    %c0 = arith.constant 0 : index
    %c0_0 = arith.constant 0 : index
    %0 = vector.load %arg3[%c0, %c0_0] : memref<1x128xf32, #tpu.memory_space<vmem>>, vector<1x128xf32>
    %1 = vector.shape_cast %0 : vector<1x128xf32> to vector<1x1x128xf32>
    %c0_1 = arith.constant 0 : index
    %c0_2 = arith.constant 0 : index
    %2 = vector.load %arg4[%c0_1, %c0_2] : memref<1x128xf32, #tpu.memory_space<vmem>>, vector<1x128xf32>
    %3 = vector.shape_cast %2 : vector<1x128xf32> to vector<1x1x128xf32>
    %c0_3 = arith.constant 0 : index
    %c0_4 = arith.constant 0 : index
    %c0_5 = arith.constant 0 : index
    %c0_6 = arith.constant 0 : index
    %4 = vector.load %arg2[%c0_3, %c0_4, %c0_5, %c0_6] : memref<1x8x16x128xbf16, #tpu.memory_space<vmem>>, vector<1x8x16x128xbf16>
    %5 = vector.shape_cast %4 : vector<1x8x16x128xbf16> to vector<8x16x128xbf16>
    %6 = arith.extf %5 : vector<8x16x128xbf16> to vector<8x16x128xf32>
    %7 = vector.broadcast %1 : vector<1x1x128xf32> to vector<8x16x128xf32>
    %8 = arith.mulf %6, %7 : vector<8x16x128xf32>
    %9 = vector.broadcast %3 : vector<1x1x128xf32> to vector<8x16x128xf32>
    %10 = arith.addf %8, %9 : vector<8x16x128xf32>
    %cst = arith.constant 0.000000e+00 : f32
    %11 = vector.broadcast %cst : f32 to vector<8x16x128xf32>
    %12 = arith.maximumf %10, %11 : vector<8x16x128xf32>
    %c0_7 = arith.constant 0 : index
    %c0_8 = arith.constant 0 : index
    %c0_9 = arith.constant 0 : index
    %c0_10 = arith.constant 0 : index
    %13 = vector.load %arg5[%c0_7, %c0_8, %c0_9, %c0_10] : memref<1x8x16x128xf32, #tpu.memory_space<vmem>>, vector<1x8x16x128xf32>
    %14 = vector.shape_cast %13 : vector<1x8x16x128xf32> to vector<8x16x128xf32>
    %15 = vector.shape_cast %12 : vector<8x16x128xf32> to vector<1x8x16x128xf32>
    tpu.vector_store %arg5[%c0_7, %c0_8, %c0_9, %c0_10], %15 {strides = array<i32>} : memref<1x8x16x128xf32, #tpu.memory_space<vmem>>, vector<1x8x16x128xf32>,
    return
  }
  func.func @transform_0(%arg0: i32, %arg1: i32) -> (i32, i32, i32, i32) {
    %c0_i32 = arith.constant 0 : i32
    %c0_i32_0 = arith.constant 0 : i32
    %c0_i32_1 = arith.constant 0 : i32
    return %arg0, %arg1, %c0_i32, %c0_i32_0 : i32, i32, i32, i32
  }
  func.func @transform_1(%arg0: i32, %arg1: i32) -> (i32, i32) {
    %c0_i32 = arith.constant 0 : i32
    %c0_i32_0 = arith.constant 0 : i32
    %c0_i32_1 = arith.constant 0 : i32
    return %c0_i32, %c0_i32_0 : i32, i32
  }
  func.func @transform_2(%arg0: i32, %arg1: i32) -> (i32, i32) {
    %c0_i32 = arith.constant 0 : i32
    %c0_i32_0 = arith.constant 0 : i32
    %c0_i32_1 = arith.constant 0 : i32
    return %c0_i32, %c0_i32_0 : i32, i32
  }
  func.func @transform_3(%arg0: i32, %arg1: i32) -> (i32, i32, i32, i32) {
    %c0_i32 = arith.constant 0 : i32
    %c0_i32_0 = arith.constant 0 : i32
    %c0_i32_1 = arith.constant 0 : i32
    return %arg0, %arg1, %c0_i32, %c0_i32_0 : i32, i32, i32, i32
  }
}

module attributes {stable_mosaic.version = 11 : i64} {
  func.func @_dw_stats_kernel(%arg0: i32, %arg1: i32, %arg2: memref<1x1x10x18x128xf32, #tpu.memory_space<vmem>>, %arg3: memref<9x128xf32, #tpu.memory_space<vmem>>, %arg4: memref<1x1x2x128xf32, #tpu.memory_space<vmem>>) attributes {dimension_semantics = [#tpu.dimension_semantics<parallel>, #tpu.dimension_semantics<parallel>], iteration_bounds = array<i64: 2, 2>, scalar_prefetch = 0 : i64, scratch_operands = 0 : i64, tpu.core_type = #tpu.core_type<tc>, window_params = [{transform_indices = @transform_0, window_bounds = array<i64: 1, 1, 10, 18, 128>}, {pipeline_mode = #tpu.pipeline_mode<synchronous>, transform_indices = @transform_1, window_bounds = array<i64: 9, 128>}, {transform_indices = @transform_2, window_bounds = array<i64: 1, 1, 2, 128>}]} {
    %c0 = arith.constant 0 : index
    %c0_0 = arith.constant 0 : index
    %0 = vector.load %arg3[%c0, %c0_0] : memref<9x128xf32, #tpu.memory_space<vmem>>, vector<9x128xf32>
    %cst = arith.constant 0.000000e+00 : f32
    %1 = vector.broadcast %cst : f32 to vector<8x16x128xf32>
    %c0_1 = arith.constant 0 : index
    %c0_2 = arith.constant 0 : index
    %c0_3 = arith.constant 0 : index
    %c0_4 = arith.constant 0 : index
    %c0_5 = arith.constant 0 : index
    %2 = vector.load %arg2[%c0_1, %c0_2, %c0_3, %c0_4, %c0_5] : memref<1x1x10x18x128xf32, #tpu.memory_space<vmem>>, vector<1x1x8x16x128xf32>
    %3 = vector.shape_cast %2 : vector<1x1x8x16x128xf32> to vector<8x16x128xf32>
    %4 = vector.extract_strided_slice %0 {offsets = [0, 0], sizes = [1, 128], strides = [1, 1]} : vector<9x128xf32> to vector<1x128xf32>
    %5 = vector.shape_cast %4 : vector<1x128xf32> to vector<128xf32>
    %6 = vector.shape_cast %5 : vector<128xf32> to vector<1x1x128xf32>
    %7 = vector.broadcast %6 : vector<1x1x128xf32> to vector<8x16x128xf32>
    %8 = arith.mulf %3, %7 : vector<8x16x128xf32>
    %9 = arith.addf %1, %8 : vector<8x16x128xf32>
    %c0_6 = arith.constant 0 : index
    %c0_7 = arith.constant 0 : index
    %c0_8 = arith.constant 0 : index
    %c1 = arith.constant 1 : index
    %c0_9 = arith.constant 0 : index
    %10 = vector.load %arg2[%c0_6, %c0_7, %c0_8, %c1, %c0_9] : memref<1x1x10x18x128xf32, #tpu.memory_space<vmem>>, vector<1x1x8x16x128xf32>
    %11 = vector.shape_cast %10 : vector<1x1x8x16x128xf32> to vector<8x16x128xf32>
    %12 = vector.extract_strided_slice %0 {offsets = [1, 0], sizes = [1, 128], strides = [1, 1]} : vector<9x128xf32> to vector<1x128xf32>
    %13 = vector.shape_cast %12 : vector<1x128xf32> to vector<128xf32>
    %14 = vector.shape_cast %13 : vector<128xf32> to vector<1x1x128xf32>
    %15 = vector.broadcast %14 : vector<1x1x128xf32> to vector<8x16x128xf32>
    %16 = arith.mulf %11, %15 : vector<8x16x128xf32>
    %17 = arith.addf %9, %16 : vector<8x16x128xf32>
    %c0_10 = arith.constant 0 : index
    %c0_11 = arith.constant 0 : index
    %c0_12 = arith.constant 0 : index
    %c2 = arith.constant 2 : index
    %c0_13 = arith.constant 0 : index
    %18 = vector.load %arg2[%c0_10, %c0_11, %c0_12, %c2, %c0_13] : memref<1x1x10x18x128xf32, #tpu.memory_space<vmem>>, vector<1x1x8x16x128xf32>
    %19 = vector.shape_cast %18 : vector<1x1x8x16x128xf32> to vector<8x16x128xf32>
    %20 = vector.extract_strided_slice %0 {offsets = [2, 0], sizes = [1, 128], strides = [1, 1]} : vector<9x128xf32> to vector<1x128xf32>
    %21 = vector.shape_cast %20 : vector<1x128xf32> to vector<128xf32>
    %22 = vector.shape_cast %21 : vector<128xf32> to vector<1x1x128xf32>
    %23 = vector.broadcast %22 : vector<1x1x128xf32> to vector<8x16x128xf32>
    %24 = arith.mulf %19, %23 : vector<8x16x128xf32>
    %25 = arith.addf %17, %24 : vector<8x16x128xf32>
    %c0_14 = arith.constant 0 : index
    %c0_15 = arith.constant 0 : index
    %c1_16 = arith.constant 1 : index
    %c0_17 = arith.constant 0 : index
    %c0_18 = arith.constant 0 : index
    %26 = vector.load %arg2[%c0_14, %c0_15, %c1_16, %c0_17, %c0_18] : memref<1x1x10x18x128xf32, #tpu.memory_space<vmem>>, vector<1x1x8x16x128xf32>
    %27 = vector.shape_cast %26 : vector<1x1x8x16x128xf32> to vector<8x16x128xf32>
    %28 = vector.extract_strided_slice %0 {offsets = [3, 0], sizes = [1, 128], strides = [1, 1]} : vector<9x128xf32> to vector<1x128xf32>
    %29 = vector.shape_cast %28 : vector<1x128xf32> to vector<128xf32>
    %30 = vector.shape_cast %29 : vector<128xf32> to vector<1x1x128xf32>
    %31 = vector.broadcast %30 : vector<1x1x128xf32> to vector<8x16x128xf32>
    %32 = arith.mulf %27, %31 : vector<8x16x128xf32>
    %33 = arith.addf %25, %32 : vector<8x16x128xf32>
    %c0_19 = arith.constant 0 : index
    %c0_20 = arith.constant 0 : index
    %c1_21 = arith.constant 1 : index
    %c1_22 = arith.constant 1 : index
    %c0_23 = arith.constant 0 : index
    %34 = vector.load %arg2[%c0_19, %c0_20, %c1_21, %c1_22, %c0_23] : memref<1x1x10x18x128xf32, #tpu.memory_space<vmem>>, vector<1x1x8x16x128xf32>
    %35 = vector.shape_cast %34 : vector<1x1x8x16x128xf32> to vector<8x16x128xf32>
    %36 = vector.extract_strided_slice %0 {offsets = [4, 0], sizes = [1, 128], strides = [1, 1]} : vector<9x128xf32> to vector<1x128xf32>
    %37 = vector.shape_cast %36 : vector<1x128xf32> to vector<128xf32>
    %38 = vector.shape_cast %37 : vector<128xf32> to vector<1x1x128xf32>
    %39 = vector.broadcast %38 : vector<1x1x128xf32> to vector<8x16x128xf32>
    %40 = arith.mulf %35, %39 : vector<8x16x128xf32>
    %41 = arith.addf %33, %40 : vector<8x16x128xf32>
    %c0_24 = arith.constant 0 : index
    %c0_25 = arith.constant 0 : index
    %c1_26 = arith.constant 1 : index
    %c2_27 = arith.constant 2 : index
    %c0_28 = arith.constant 0 : index
    %42 = vector.load %arg2[%c0_24, %c0_25, %c1_26, %c2_27, %c0_28] : memref<1x1x10x18x128xf32, #tpu.memory_space<vmem>>, vector<1x1x8x16x128xf32>
    %43 = vector.shape_cast %42 : vector<1x1x8x16x128xf32> to vector<8x16x128xf32>
    %44 = vector.extract_strided_slice %0 {offsets = [5, 0], sizes = [1, 128], strides = [1, 1]} : vector<9x128xf32> to vector<1x128xf32>
    %45 = vector.shape_cast %44 : vector<1x128xf32> to vector<128xf32>
    %46 = vector.shape_cast %45 : vector<128xf32> to vector<1x1x128xf32>
    %47 = vector.broadcast %46 : vector<1x1x128xf32> to vector<8x16x128xf32>
    %48 = arith.mulf %43, %47 : vector<8x16x128xf32>
    %49 = arith.addf %41, %48 : vector<8x16x128xf32>
    %c0_29 = arith.constant 0 : index
    %c0_30 = arith.constant 0 : index
    %c2_31 = arith.constant 2 : index
    %c0_32 = arith.constant 0 : index
    %c0_33 = arith.constant 0 : index
    %50 = vector.load %arg2[%c0_29, %c0_30, %c2_31, %c0_32, %c0_33] : memref<1x1x10x18x128xf32, #tpu.memory_space<vmem>>, vector<1x1x8x16x128xf32>
    %51 = vector.shape_cast %50 : vector<1x1x8x16x128xf32> to vector<8x16x128xf32>
    %52 = vector.extract_strided_slice %0 {offsets = [6, 0], sizes = [1, 128], strides = [1, 1]} : vector<9x128xf32> to vector<1x128xf32>
    %53 = vector.shape_cast %52 : vector<1x128xf32> to vector<128xf32>
    %54 = vector.shape_cast %53 : vector<128xf32> to vector<1x1x128xf32>
    %55 = vector.broadcast %54 : vector<1x1x128xf32> to vector<8x16x128xf32>
    %56 = arith.mulf %51, %55 : vector<8x16x128xf32>
    %57 = arith.addf %49, %56 : vector<8x16x128xf32>
    %c0_34 = arith.constant 0 : index
    %c0_35 = arith.constant 0 : index
    %c2_36 = arith.constant 2 : index
    %c1_37 = arith.constant 1 : index
    %c0_38 = arith.constant 0 : index
    %58 = vector.load %arg2[%c0_34, %c0_35, %c2_36, %c1_37, %c0_38] : memref<1x1x10x18x128xf32, #tpu.memory_space<vmem>>, vector<1x1x8x16x128xf32>
    %59 = vector.shape_cast %58 : vector<1x1x8x16x128xf32> to vector<8x16x128xf32>
    %60 = vector.extract_strided_slice %0 {offsets = [7, 0], sizes = [1, 128], strides = [1, 1]} : vector<9x128xf32> to vector<1x128xf32>
    %61 = vector.shape_cast %60 : vector<1x128xf32> to vector<128xf32>
    %62 = vector.shape_cast %61 : vector<128xf32> to vector<1x1x128xf32>
    %63 = vector.broadcast %62 : vector<1x1x128xf32> to vector<8x16x128xf32>
    %64 = arith.mulf %59, %63 : vector<8x16x128xf32>
    %65 = arith.addf %57, %64 : vector<8x16x128xf32>
    %c0_39 = arith.constant 0 : index
    %c0_40 = arith.constant 0 : index
    %c2_41 = arith.constant 2 : index
    %c2_42 = arith.constant 2 : index
    %c0_43 = arith.constant 0 : index
    %66 = vector.load %arg2[%c0_39, %c0_40, %c2_41, %c2_42, %c0_43] : memref<1x1x10x18x128xf32, #tpu.memory_space<vmem>>, vector<1x1x8x16x128xf32>
    %67 = vector.shape_cast %66 : vector<1x1x8x16x128xf32> to vector<8x16x128xf32>
    %68 = vector.extract_strided_slice %0 {offsets = [8, 0], sizes = [1, 128], strides = [1, 1]} : vector<9x128xf32> to vector<1x128xf32>
    %69 = vector.shape_cast %68 : vector<1x128xf32> to vector<128xf32>
    %70 = vector.shape_cast %69 : vector<128xf32> to vector<1x1x128xf32>
    %71 = vector.broadcast %70 : vector<1x1x128xf32> to vector<8x16x128xf32>
    %72 = arith.mulf %67, %71 : vector<8x16x128xf32>
    %73 = arith.addf %65, %72 : vector<8x16x128xf32>
    %74 = vector.shape_cast %73 : vector<8x16x128xf32> to vector<128x128xf32>
    %cst_44 = arith.constant dense<0.000000e+00> : vector<128xf32>
    %75 = vector.multi_reduction <add>, %74, %cst_44 [0] : vector<128x128xf32> to vector<128xf32>
    %76 = vector.shape_cast %75 : vector<128xf32> to vector<1x128xf32>
    %77 = arith.mulf %74, %74 : vector<128x128xf32>
    %cst_45 = arith.constant dense<0.000000e+00> : vector<128xf32>
    %78 = vector.multi_reduction <add>, %77, %cst_45 [0] : vector<128x128xf32> to vector<128xf32>
    %79 = vector.shape_cast %78 : vector<128xf32> to vector<1x128xf32>
    %80 = tpu.concatenate %76, %79 in 0 : vector<1x128xf32>, vector<1x128xf32> -> vector<2x128xf32>
    %c0_46 = arith.constant 0 : index
    %c0_47 = arith.constant 0 : index
    %c0_48 = arith.constant 0 : index
    %c0_49 = arith.constant 0 : index
    %81 = vector.load %arg4[%c0_46, %c0_47, %c0_48, %c0_49] : memref<1x1x2x128xf32, #tpu.memory_space<vmem>>, vector<1x1x2x128xf32>
    %82 = vector.shape_cast %81 : vector<1x1x2x128xf32> to vector<2x128xf32>
    %83 = vector.shape_cast %80 : vector<2x128xf32> to vector<1x1x2x128xf32>
    tpu.vector_store %arg4[%c0_46, %c0_47, %c0_48, %c0_49], %83 {strides = array<i32>} : memref<1x1x2x128xf32, #tpu.memory_space<vmem>>, vector<1x1x2x128xf32>,
    return
  }
  func.func @transform_0(%arg0: i32, %arg1: i32) -> (i32, i32, i32, i32, i32) {
    %c0_i32 = arith.constant 0 : i32
    %c0_i32_0 = arith.constant 0 : i32
    %c0_i32_1 = arith.constant 0 : i32
    %c0_i32_2 = arith.constant 0 : i32
    return %arg0, %arg1, %c0_i32, %c0_i32_0, %c0_i32_1 : i32, i32, i32, i32, i32
  }
  func.func @transform_1(%arg0: i32, %arg1: i32) -> (i32, i32) {
    %c0_i32 = arith.constant 0 : i32
    %c0_i32_0 = arith.constant 0 : i32
    %c0_i32_1 = arith.constant 0 : i32
    return %c0_i32, %c0_i32_0 : i32, i32
  }
  func.func @transform_2(%arg0: i32, %arg1: i32) -> (i32, i32, i32, i32) {
    %c0_i32 = arith.constant 0 : i32
    %c0_i32_0 = arith.constant 0 : i32
    %c0_i32_1 = arith.constant 0 : i32
    return %arg0, %arg1, %c0_i32, %c0_i32_0 : i32, i32, i32, i32
  }
}

module attributes {stable_mosaic.version = 11 : i64} {
  func.func @_pointwise_kernel(%arg0: i32, %arg1: i32, %arg2: memref<1x1x10x18x128xf32, #tpu.memory_space<vmem>>, %arg3: memref<9x128xf32, #tpu.memory_space<vmem>>, %arg4: memref<1x128xf32, #tpu.memory_space<vmem>>, %arg5: memref<1x128xf32, #tpu.memory_space<vmem>>, %arg6: memref<128x128xbf16, #tpu.memory_space<vmem>>, %arg7: memref<1x8x16x128xbf16, #tpu.memory_space<vmem>>, %arg8: memref<1x1x2x128xf32, #tpu.memory_space<vmem>>) attributes {dimension_semantics = [#tpu.dimension_semantics<parallel>, #tpu.dimension_semantics<parallel>], iteration_bounds = array<i64: 2, 2>, scalar_prefetch = 0 : i64, scratch_operands = 0 : i64, tpu.core_type = #tpu.core_type<tc>, window_params = [{transform_indices = @transform_0, window_bounds = array<i64: 1, 1, 10, 18, 128>}, {pipeline_mode = #tpu.pipeline_mode<synchronous>, transform_indices = @transform_1, window_bounds = array<i64: 9, 128>}, {pipeline_mode = #tpu.pipeline_mode<synchronous>, transform_indices = @transform_2, window_bounds = array<i64: 1, 128>}, {pipeline_mode = #tpu.pipeline_mode<synchronous>, transform_indices = @transform_3, window_bounds = array<i64: 1, 128>}, {pipeline_mode = #tpu.pipeline_mode<synchronous>, transform_indices = @transform_4, window_bounds = array<i64: 128, 128>}, {transform_indices = @transform_5, window_bounds = array<i64: 1, 8, 16, 128>}, {transform_indices = @transform_6, window_bounds = array<i64: 1, 1, 2, 128>}]} {
    %c0 = arith.constant 0 : index
    %c0_0 = arith.constant 0 : index
    %0 = vector.load %arg3[%c0, %c0_0] : memref<9x128xf32, #tpu.memory_space<vmem>>, vector<9x128xf32>
    %cst = arith.constant 0.000000e+00 : f32
    %1 = vector.broadcast %cst : f32 to vector<8x16x128xf32>
    %c0_1 = arith.constant 0 : index
    %c0_2 = arith.constant 0 : index
    %c0_3 = arith.constant 0 : index
    %c0_4 = arith.constant 0 : index
    %c0_5 = arith.constant 0 : index
    %2 = vector.load %arg2[%c0_1, %c0_2, %c0_3, %c0_4, %c0_5] : memref<1x1x10x18x128xf32, #tpu.memory_space<vmem>>, vector<1x1x8x16x128xf32>
    %3 = vector.shape_cast %2 : vector<1x1x8x16x128xf32> to vector<8x16x128xf32>
    %4 = vector.extract_strided_slice %0 {offsets = [0, 0], sizes = [1, 128], strides = [1, 1]} : vector<9x128xf32> to vector<1x128xf32>
    %5 = vector.shape_cast %4 : vector<1x128xf32> to vector<128xf32>
    %6 = vector.shape_cast %5 : vector<128xf32> to vector<1x1x128xf32>
    %7 = vector.broadcast %6 : vector<1x1x128xf32> to vector<8x16x128xf32>
    %8 = arith.mulf %3, %7 : vector<8x16x128xf32>
    %9 = arith.addf %1, %8 : vector<8x16x128xf32>
    %c0_6 = arith.constant 0 : index
    %c0_7 = arith.constant 0 : index
    %c0_8 = arith.constant 0 : index
    %c1 = arith.constant 1 : index
    %c0_9 = arith.constant 0 : index
    %10 = vector.load %arg2[%c0_6, %c0_7, %c0_8, %c1, %c0_9] : memref<1x1x10x18x128xf32, #tpu.memory_space<vmem>>, vector<1x1x8x16x128xf32>
    %11 = vector.shape_cast %10 : vector<1x1x8x16x128xf32> to vector<8x16x128xf32>
    %12 = vector.extract_strided_slice %0 {offsets = [1, 0], sizes = [1, 128], strides = [1, 1]} : vector<9x128xf32> to vector<1x128xf32>
    %13 = vector.shape_cast %12 : vector<1x128xf32> to vector<128xf32>
    %14 = vector.shape_cast %13 : vector<128xf32> to vector<1x1x128xf32>
    %15 = vector.broadcast %14 : vector<1x1x128xf32> to vector<8x16x128xf32>
    %16 = arith.mulf %11, %15 : vector<8x16x128xf32>
    %17 = arith.addf %9, %16 : vector<8x16x128xf32>
    %c0_10 = arith.constant 0 : index
    %c0_11 = arith.constant 0 : index
    %c0_12 = arith.constant 0 : index
    %c2 = arith.constant 2 : index
    %c0_13 = arith.constant 0 : index
    %18 = vector.load %arg2[%c0_10, %c0_11, %c0_12, %c2, %c0_13] : memref<1x1x10x18x128xf32, #tpu.memory_space<vmem>>, vector<1x1x8x16x128xf32>
    %19 = vector.shape_cast %18 : vector<1x1x8x16x128xf32> to vector<8x16x128xf32>
    %20 = vector.extract_strided_slice %0 {offsets = [2, 0], sizes = [1, 128], strides = [1, 1]} : vector<9x128xf32> to vector<1x128xf32>
    %21 = vector.shape_cast %20 : vector<1x128xf32> to vector<128xf32>
    %22 = vector.shape_cast %21 : vector<128xf32> to vector<1x1x128xf32>
    %23 = vector.broadcast %22 : vector<1x1x128xf32> to vector<8x16x128xf32>
    %24 = arith.mulf %19, %23 : vector<8x16x128xf32>
    %25 = arith.addf %17, %24 : vector<8x16x128xf32>
    %c0_14 = arith.constant 0 : index
    %c0_15 = arith.constant 0 : index
    %c1_16 = arith.constant 1 : index
    %c0_17 = arith.constant 0 : index
    %c0_18 = arith.constant 0 : index
    %26 = vector.load %arg2[%c0_14, %c0_15, %c1_16, %c0_17, %c0_18] : memref<1x1x10x18x128xf32, #tpu.memory_space<vmem>>, vector<1x1x8x16x128xf32>
    %27 = vector.shape_cast %26 : vector<1x1x8x16x128xf32> to vector<8x16x128xf32>
    %28 = vector.extract_strided_slice %0 {offsets = [3, 0], sizes = [1, 128], strides = [1, 1]} : vector<9x128xf32> to vector<1x128xf32>
    %29 = vector.shape_cast %28 : vector<1x128xf32> to vector<128xf32>
    %30 = vector.shape_cast %29 : vector<128xf32> to vector<1x1x128xf32>
    %31 = vector.broadcast %30 : vector<1x1x128xf32> to vector<8x16x128xf32>
    %32 = arith.mulf %27, %31 : vector<8x16x128xf32>
    %33 = arith.addf %25, %32 : vector<8x16x128xf32>
    %c0_19 = arith.constant 0 : index
    %c0_20 = arith.constant 0 : index
    %c1_21 = arith.constant 1 : index
    %c1_22 = arith.constant 1 : index
    %c0_23 = arith.constant 0 : index
    %34 = vector.load %arg2[%c0_19, %c0_20, %c1_21, %c1_22, %c0_23] : memref<1x1x10x18x128xf32, #tpu.memory_space<vmem>>, vector<1x1x8x16x128xf32>
    %35 = vector.shape_cast %34 : vector<1x1x8x16x128xf32> to vector<8x16x128xf32>
    %36 = vector.extract_strided_slice %0 {offsets = [4, 0], sizes = [1, 128], strides = [1, 1]} : vector<9x128xf32> to vector<1x128xf32>
    %37 = vector.shape_cast %36 : vector<1x128xf32> to vector<128xf32>
    %38 = vector.shape_cast %37 : vector<128xf32> to vector<1x1x128xf32>
    %39 = vector.broadcast %38 : vector<1x1x128xf32> to vector<8x16x128xf32>
    %40 = arith.mulf %35, %39 : vector<8x16x128xf32>
    %41 = arith.addf %33, %40 : vector<8x16x128xf32>
    %c0_24 = arith.constant 0 : index
    %c0_25 = arith.constant 0 : index
    %c1_26 = arith.constant 1 : index
    %c2_27 = arith.constant 2 : index
    %c0_28 = arith.constant 0 : index
    %42 = vector.load %arg2[%c0_24, %c0_25, %c1_26, %c2_27, %c0_28] : memref<1x1x10x18x128xf32, #tpu.memory_space<vmem>>, vector<1x1x8x16x128xf32>
    %43 = vector.shape_cast %42 : vector<1x1x8x16x128xf32> to vector<8x16x128xf32>
    %44 = vector.extract_strided_slice %0 {offsets = [5, 0], sizes = [1, 128], strides = [1, 1]} : vector<9x128xf32> to vector<1x128xf32>
    %45 = vector.shape_cast %44 : vector<1x128xf32> to vector<128xf32>
    %46 = vector.shape_cast %45 : vector<128xf32> to vector<1x1x128xf32>
    %47 = vector.broadcast %46 : vector<1x1x128xf32> to vector<8x16x128xf32>
    %48 = arith.mulf %43, %47 : vector<8x16x128xf32>
    %49 = arith.addf %41, %48 : vector<8x16x128xf32>
    %c0_29 = arith.constant 0 : index
    %c0_30 = arith.constant 0 : index
    %c2_31 = arith.constant 2 : index
    %c0_32 = arith.constant 0 : index
    %c0_33 = arith.constant 0 : index
    %50 = vector.load %arg2[%c0_29, %c0_30, %c2_31, %c0_32, %c0_33] : memref<1x1x10x18x128xf32, #tpu.memory_space<vmem>>, vector<1x1x8x16x128xf32>
    %51 = vector.shape_cast %50 : vector<1x1x8x16x128xf32> to vector<8x16x128xf32>
    %52 = vector.extract_strided_slice %0 {offsets = [6, 0], sizes = [1, 128], strides = [1, 1]} : vector<9x128xf32> to vector<1x128xf32>
    %53 = vector.shape_cast %52 : vector<1x128xf32> to vector<128xf32>
    %54 = vector.shape_cast %53 : vector<128xf32> to vector<1x1x128xf32>
    %55 = vector.broadcast %54 : vector<1x1x128xf32> to vector<8x16x128xf32>
    %56 = arith.mulf %51, %55 : vector<8x16x128xf32>
    %57 = arith.addf %49, %56 : vector<8x16x128xf32>
    %c0_34 = arith.constant 0 : index
    %c0_35 = arith.constant 0 : index
    %c2_36 = arith.constant 2 : index
    %c1_37 = arith.constant 1 : index
    %c0_38 = arith.constant 0 : index
    %58 = vector.load %arg2[%c0_34, %c0_35, %c2_36, %c1_37, %c0_38] : memref<1x1x10x18x128xf32, #tpu.memory_space<vmem>>, vector<1x1x8x16x128xf32>
    %59 = vector.shape_cast %58 : vector<1x1x8x16x128xf32> to vector<8x16x128xf32>
    %60 = vector.extract_strided_slice %0 {offsets = [7, 0], sizes = [1, 128], strides = [1, 1]} : vector<9x128xf32> to vector<1x128xf32>
    %61 = vector.shape_cast %60 : vector<1x128xf32> to vector<128xf32>
    %62 = vector.shape_cast %61 : vector<128xf32> to vector<1x1x128xf32>
    %63 = vector.broadcast %62 : vector<1x1x128xf32> to vector<8x16x128xf32>
    %64 = arith.mulf %59, %63 : vector<8x16x128xf32>
    %65 = arith.addf %57, %64 : vector<8x16x128xf32>
    %c0_39 = arith.constant 0 : index
    %c0_40 = arith.constant 0 : index
    %c2_41 = arith.constant 2 : index
    %c2_42 = arith.constant 2 : index
    %c0_43 = arith.constant 0 : index
    %66 = vector.load %arg2[%c0_39, %c0_40, %c2_41, %c2_42, %c0_43] : memref<1x1x10x18x128xf32, #tpu.memory_space<vmem>>, vector<1x1x8x16x128xf32>
    %67 = vector.shape_cast %66 : vector<1x1x8x16x128xf32> to vector<8x16x128xf32>
    %68 = vector.extract_strided_slice %0 {offsets = [8, 0], sizes = [1, 128], strides = [1, 1]} : vector<9x128xf32> to vector<1x128xf32>
    %69 = vector.shape_cast %68 : vector<1x128xf32> to vector<128xf32>
    %70 = vector.shape_cast %69 : vector<128xf32> to vector<1x1x128xf32>
    %71 = vector.broadcast %70 : vector<1x1x128xf32> to vector<8x16x128xf32>
    %72 = arith.mulf %67, %71 : vector<8x16x128xf32>
    %73 = arith.addf %65, %72 : vector<8x16x128xf32>
    %c0_44 = arith.constant 0 : index
    %c0_45 = arith.constant 0 : index
    %74 = vector.load %arg4[%c0_44, %c0_45] : memref<1x128xf32, #tpu.memory_space<vmem>>, vector<1x128xf32>
    %75 = vector.shape_cast %74 : vector<1x128xf32> to vector<1x1x128xf32>
    %c0_46 = arith.constant 0 : index
    %c0_47 = arith.constant 0 : index
    %76 = vector.load %arg5[%c0_46, %c0_47] : memref<1x128xf32, #tpu.memory_space<vmem>>, vector<1x128xf32>
    %77 = vector.shape_cast %76 : vector<1x128xf32> to vector<1x1x128xf32>
    %78 = vector.broadcast %75 : vector<1x1x128xf32> to vector<8x16x128xf32>
    %79 = arith.mulf %73, %78 : vector<8x16x128xf32>
    %80 = vector.broadcast %77 : vector<1x1x128xf32> to vector<8x16x128xf32>
    %81 = arith.addf %79, %80 : vector<8x16x128xf32>
    %cst_48 = arith.constant 0.000000e+00 : f32
    %82 = vector.broadcast %cst_48 : f32 to vector<8x16x128xf32>
    %83 = arith.maximumf %81, %82 : vector<8x16x128xf32>
    %84 = arith.truncf %83 : vector<8x16x128xf32> to vector<8x16x128xbf16>
    %85 = vector.shape_cast %84 : vector<8x16x128xbf16> to vector<128x128xbf16>
    %c0_49 = arith.constant 0 : index
    %c0_50 = arith.constant 0 : index
    %86 = vector.load %arg6[%c0_49, %c0_50] : memref<128x128xbf16, #tpu.memory_space<vmem>>, vector<128x128xbf16>
    %cst_51 = arith.constant dense<0.000000e+00> : vector<128x128xf32>
    %87 = tpu.matmul %85, %86, %cst_51 {dimension_numbers = #tpu.dot_dimension_numbers<[1], [0], [0], [1], [0, 0, 1, 1], [], []>} : vector<128x128xbf16>, vector<128x128xbf16>, vector<128x128xf32> -> vector<128x128xf32>
    %cst_52 = arith.constant dense<0.000000e+00> : vector<128xf32>
    %88 = vector.multi_reduction <add>, %87, %cst_52 [0] : vector<128x128xf32> to vector<128xf32>
    %89 = vector.shape_cast %88 : vector<128xf32> to vector<1x128xf32>
    %90 = arith.mulf %87, %87 : vector<128x128xf32>
    %cst_53 = arith.constant dense<0.000000e+00> : vector<128xf32>
    %91 = vector.multi_reduction <add>, %90, %cst_53 [0] : vector<128x128xf32> to vector<128xf32>
    %92 = vector.shape_cast %91 : vector<128xf32> to vector<1x128xf32>
    %93 = tpu.concatenate %89, %92 in 0 : vector<1x128xf32>, vector<1x128xf32> -> vector<2x128xf32>
    %c0_54 = arith.constant 0 : index
    %c0_55 = arith.constant 0 : index
    %c0_56 = arith.constant 0 : index
    %c0_57 = arith.constant 0 : index
    %94 = vector.load %arg8[%c0_54, %c0_55, %c0_56, %c0_57] : memref<1x1x2x128xf32, #tpu.memory_space<vmem>>, vector<1x1x2x128xf32>
    %95 = vector.shape_cast %94 : vector<1x1x2x128xf32> to vector<2x128xf32>
    %96 = vector.shape_cast %93 : vector<2x128xf32> to vector<1x1x2x128xf32>
    tpu.vector_store %arg8[%c0_54, %c0_55, %c0_56, %c0_57], %96 {strides = array<i32>} : memref<1x1x2x128xf32, #tpu.memory_space<vmem>>, vector<1x1x2x128xf32>,
    %97 = vector.shape_cast %87 : vector<128x128xf32> to vector<8x16x128xf32>
    %98 = arith.truncf %97 : vector<8x16x128xf32> to vector<8x16x128xbf16>
    %c0_58 = arith.constant 0 : index
    %c0_59 = arith.constant 0 : index
    %c0_60 = arith.constant 0 : index
    %c0_61 = arith.constant 0 : index
    %99 = vector.load %arg7[%c0_58, %c0_59, %c0_60, %c0_61] : memref<1x8x16x128xbf16, #tpu.memory_space<vmem>>, vector<1x8x16x128xbf16>
    %100 = vector.shape_cast %99 : vector<1x8x16x128xbf16> to vector<8x16x128xbf16>
    %101 = vector.shape_cast %98 : vector<8x16x128xbf16> to vector<1x8x16x128xbf16>
    tpu.vector_store %arg7[%c0_58, %c0_59, %c0_60, %c0_61], %101 {strides = array<i32>} : memref<1x8x16x128xbf16, #tpu.memory_space<vmem>>, vector<1x8x16x128xbf16>,
    return
  }
  func.func @transform_0(%arg0: i32, %arg1: i32) -> (i32, i32, i32, i32, i32) {
    %c0_i32 = arith.constant 0 : i32
    %c0_i32_0 = arith.constant 0 : i32
    %c0_i32_1 = arith.constant 0 : i32
    %c0_i32_2 = arith.constant 0 : i32
    return %arg0, %arg1, %c0_i32, %c0_i32_0, %c0_i32_1 : i32, i32, i32, i32, i32
  }
  func.func @transform_1(%arg0: i32, %arg1: i32) -> (i32, i32) {
    %c0_i32 = arith.constant 0 : i32
    %c0_i32_0 = arith.constant 0 : i32
    %c0_i32_1 = arith.constant 0 : i32
    return %c0_i32, %c0_i32_0 : i32, i32
  }
  func.func @transform_2(%arg0: i32, %arg1: i32) -> (i32, i32) {
    %c0_i32 = arith.constant 0 : i32
    %c0_i32_0 = arith.constant 0 : i32
    %c0_i32_1 = arith.constant 0 : i32
    return %c0_i32, %c0_i32_0 : i32, i32
  }
  func.func @transform_3(%arg0: i32, %arg1: i32) -> (i32, i32) {
    %c0_i32 = arith.constant 0 : i32
    %c0_i32_0 = arith.constant 0 : i32
    %c0_i32_1 = arith.constant 0 : i32
    return %c0_i32, %c0_i32_0 : i32, i32
  }
  func.func @transform_4(%arg0: i32, %arg1: i32) -> (i32, i32) {
    %c0_i32 = arith.constant 0 : i32
    %c0_i32_0 = arith.constant 0 : i32
    %c0_i32_1 = arith.constant 0 : i32
    return %c0_i32, %c0_i32_0 : i32, i32
  }
  func.func @transform_5(%arg0: i32, %arg1: i32) -> (i32, i32, i32, i32) {
    %c0_i32 = arith.constant 0 : i32
    %c0_i32_0 = arith.constant 0 : i32
    %c0_i32_1 = arith.constant 0 : i32
    return %arg0, %arg1, %c0_i32, %c0_i32_0 : i32, i32, i32, i32
  }
  func.func @transform_6(%arg0: i32, %arg1: i32) -> (i32, i32, i32, i32) {
    %c0_i32 = arith.constant 0 : i32
    %c0_i32_0 = arith.constant 0 : i32
    %c0_i32_1 = arith.constant 0 : i32
    return %arg0, %arg1, %c0_i32, %c0_i32_0 : i32, i32, i32, i32
  }
}

</mosaic_0001>

<llo_original>
// kernel: mobilenet_block.5
$region0: #{mobilenet_block.5}
  #allocation0 [shape = 'u32[]', space=smem, size = 0x4, offset = 0x4, fixed_abs, tag = 'smem constant byte address 0x4 - core index']
  #allocation1 [shape = 'u32[144,128]{1,0:T(1,128)}', space=vmem, size = 0x12000, scoped, tag = 'internal scratch']
  %s0 = inlined_call_operand.vmem [shape: bf16[2,16,16,128], index: 0, kind: input, shape index: {}]
  %s1 = inlined_call_operand.vmem [shape: f32[1,128], index: 1, kind: input, shape index: {}]
  %s2 = inlined_call_operand.vmem [shape: f32[1,128], index: 2, kind: input, shape index: {}]
  %s3 = inlined_call_operand.vmem [shape: f32[2,16,16,128], index: 3, kind: output, shape index: {}]
  %s4 = sld [smem:[#allocation0]]
  $region45: #{mobilenet_block.5} parent=0
    _
  %s6 = ssub.s32 1, %s4
  %s7 = scalar_select 0, %s6, %s4
  loop: start=0, step=1, limit=6
  $region2: #{mobilenet_block.5} parent=0 // loop_pre_header
    _
  $region3: #{mobilenet_block.5} parent=0 // loop_header
    %s9 = sphi 0, %s13
    %p10 = scmp.ge.s32.totalorder %s9, 6
    %s16 = sphi 0, %s28
    %s17 = sphi 0, %s24
    %s18 = sphi 0, %s16
    %s19 = sphi 0, %s17
    %s20 = sphi 0, %s18
    %s21 = sphi 0, %s19
    %s33 = sphi 0, %s35
    %s36 = sphi 0, %s33
    %s37 = sphi 0, %s36
    %s53 = sphi 0, %s37
    %s57 = sphi 0, %s57
    %s59 = sphi 0, %s57
    %s60 = sphi 0, %s59
    %s74 = sphi 0, %s60
    %s78 = sphi 0, %s78
    %s80 = sphi 0, %s78
    %s81 = sphi 0, %s80
    %s95 = sphi 0, %s81
    %s103 = sphi 0, %s105
    %s106 = sphi 0, %s103
    %s107 = sphi 0, %s106
    %s123 = sphi 0, %s107
  $region4: #{mobilenet_block.5} parent=0 // loop_header_branch
    %12 = sbr.rel (%p10) target = $region8
  $region5: #{mobilenet_block.5} parent=0 // loop_body
    %s14 = ssub.s32 %s9, 1
    %s15 = ssub.s32 %s9, 2
    %s22 = sadd.s32 1, %s17
    %p23 = scmp.ge.s32.totalorder %s22, 2
    %s24 = scalar_select %p23, 0, %s22
    %s25 = sadd.s32 1, %s16
    %s26 = scalar_select %p23, %s25, %s16
    %p27 = scmp.ge.s32.totalorder %s26, 2
    %s28 = scalar_select %p27, 0, %s26
    %s29 = ssub.s32 %s16, %s28
    %s30 = ssub.s32 %s17, %s24
    %s31 = sor.u32 %s29, %s30
    %p32 = scmp.eq.s32.totalorder %s31, 0
    %s34 = sadd.s32 %s33, 1
    %s35 = scalar_select %p32, %s33, %s34
    %p38 = pneg %p32
    %p39 = scmp.eq.s32.totalorder %s9, 3
    %p40 = por %p38, %p39
    %p41 = scmp.ne.s32.totalorder %s33, %s36
    %p42 = scmp.eq.s32.totalorder %s9, 0
    %p43 = por %p41, %p42
    %p44 = scmp.ne.s32.totalorder %s33, %s36
    %p45 = scmp.eq.s32.totalorder %s14, 3
    %p46 = por %p44, %p45
    %p47 = scmp.ne.s32.totalorder %s36, %s37
    %p48 = scmp.eq.s32.totalorder %s14, 0
    %p49 = por %p47, %p48
    %p50 = scmp.ne.s32.totalorder %s36, %s37
    %p51 = scmp.eq.s32.totalorder %s15, 3
    %p52 = por %p50, %p51
    %p54 = scmp.ne.s32.totalorder %s37, %s53
    %p55 = scmp.eq.s32.totalorder %s15, 0
    %p56 = por %p54, %p55
    %s58 = sadd.s32 %s57, 1
    %p61 = scmp.eq.s32.totalorder %s9, 3
    %p62 = scmp.ne.s32.totalorder %s57, %s59
    %p63 = scmp.eq.s32.totalorder %s9, 0
    %p64 = por %p62, %p63
    %p65 = scmp.ne.s32.totalorder %s57, %s59
    %p66 = scmp.eq.s32.totalorder %s14, 3
    %p67 = por %p65, %p66
    %p68 = scmp.ne.s32.totalorder %s59, %s60
    %p69 = scmp.eq.s32.totalorder %s14, 0
    %p70 = por %p68, %p69
    %p71 = scmp.ne.s32.totalorder %s59, %s60
    %p72 = scmp.eq.s32.totalorder %s15, 3
    %p73 = por %p71, %p72
    %p75 = scmp.ne.s32.totalorder %s60, %s74
    %p76 = scmp.eq.s32.totalorder %s15, 0
    %p77 = por %p75, %p76
    %s79 = sadd.s32 %s78, 1
    %p82 = scmp.eq.s32.totalorder %s9, 3
    %p83 = scmp.ne.s32.totalorder %s78, %s80
    %p84 = scmp.eq.s32.totalorder %s9, 0
    %p85 = por %p83, %p84
    %p86 = scmp.ne.s32.totalorder %s78, %s80
    %p87 = scmp.eq.s32.totalorder %s14, 3
    %p88 = por %p86, %p87
    %p89 = scmp.ne.s32.totalorder %s80, %s81
    %p90 = scmp.eq.s32.totalorder %s14, 0
    %p91 = por %p89, %p90
    %p92 = scmp.ne.s32.totalorder %s80, %s81
    %p93 = scmp.eq.s32.totalorder %s15, 3
    %p94 = por %p92, %p93
    %p96 = scmp.ne.s32.totalorder %s81, %s95
    %p97 = scmp.eq.s32.totalorder %s15, 0
    %p98 = por %p96, %p97
    %s99 = ssub.s32 %s16, %s28
    %s100 = ssub.s32 %s17, %s24
    %s101 = sor.u32 %s99, %s100
    %p102 = scmp.eq.s32.totalorder %s101, 0
    %s104 = sadd.s32 %s103, 1
    %s105 = scalar_select %p102, %s103, %s104
    %p108 = pneg %p102
    %p109 = scmp.eq.s32.totalorder %s9, 3
    %p110 = por %p108, %p109
    %p111 = scmp.ne.s32.totalorder %s103, %s106
    %p112 = scmp.eq.s32.totalorder %s9, 0
    %p113 = por %p111, %p112
    %p114 = scmp.ne.s32.totalorder %s103, %s106
    %p115 = scmp.eq.s32.totalorder %s14, 3
    %p116 = por %p114, %p115
    %p117 = scmp.ne.s32.totalorder %s106, %s107
    %p118 = scmp.eq.s32.totalorder %s14, 0
    %p119 = por %p117, %p118
    %p120 = scmp.ne.s32.totalorder %s106, %s107
    %p121 = scmp.eq.s32.totalorder %s15, 3
    %p122 = por %p120, %p121
    %p124 = scmp.ne.s32.totalorder %s107, %s123
    %p125 = scmp.eq.s32.totalorder %s15, 0
    %p126 = por %p124, %p125
    %p127 = scmp.le.s32.totalorder 1, %s9
    %p128 = scmp.lt.s32.totalorder %s9, 5
    %p129 = pnand %p127, %p128
    %p130 = pneg %p129
    // Predicated region
    $region9: #{mobilenet_block.5} parent=5 // pred_check
      _
    $region10: #{mobilenet_block.5} parent=5 // pred_check_branch
      %132 = sbr.rel (%p129) target = $region12
    $region11: #{mobilenet_block.5} parent=5 // pred_region
      %s133 = ssub.s32 %s9, 1
      // Predicated region
      $region13: #{mobilenet_block.5} parent=11 // pred_check
        %p134 = pneg %p70
      $region14: #{mobilenet_block.5} parent=11 // pred_check_branch
        %136 = sbr.rel (%p134) target = $region16
      $region15: #{mobilenet_block.5} parent=11 // pred_region
        _
      $region16: #{mobilenet_block.5} parent=11 // pred_fallthru
        _
      // Predicated region
      $region17: #{mobilenet_block.5} parent=11 // pred_check
        %p137 = pneg %p91
      $region18: #{mobilenet_block.5} parent=11 // pred_check_branch
        %139 = sbr.rel (%p137) target = $region20
      $region19: #{mobilenet_block.5} parent=11 // pred_region
        _
      $region20: #{mobilenet_block.5} parent=11 // pred_fallthru
        _
    $region12: #{mobilenet_block.5} parent=5 // pred_fallthru
      _
    %p140 = scmp.lt.s32.totalorder %s9, 4
    // Predicated region
    $region21: #{mobilenet_block.5} parent=5 // pred_check
      %p141 = pneg %p140
    $region22: #{mobilenet_block.5} parent=5 // pred_check_branch
      %143 = sbr.rel (%p141) target = $region24
    $region23: #{mobilenet_block.5} parent=5 // pred_region
      // Predicated region
      $region25: #{mobilenet_block.5} parent=23 // pred_check
        %p144 = pneg %p43
      $region26: #{mobilenet_block.5} parent=23 // pred_check_branch
        %146 = sbr.rel (%p144) target = $region28
      $region27: #{mobilenet_block.5} parent=23 // pred_region
        %s147 = smul.u32 8, %s17
        %p148 = scmp.lt.s32.totalorder %s16, 1
        %s149 = scalar_select %p148, %s16, 1
        %p150 = scmp.lt.s32.totalorder %s147, 15
        %s151 = scalar_select %p150, %s147, 15
        %s152 = smul.addr %s151, 2
        %s153 = smul.addr %s149, 32
        %s154 = sadd.s32 %s152, %s153
        %s155 = smul.addr %s154, 4
        %s156 = scalar_lea.vmem %s0, %s155
        %s157 = smul.u32 8, %s17
      $region28: #{mobilenet_block.5} parent=23 // pred_fallthru
        _
    $region24: #{mobilenet_block.5} parent=5 // pred_fallthru
      _
    %p158 = scmp.le.s32.totalorder 1, %s9
    %p159 = scmp.lt.s32.totalorder %s9, 5
    %p160 = pnand %p158, %p159
    %p161 = pneg %p160
    // Predicated region
    $region29: #{mobilenet_block.5} parent=5 // pred_check
      _
    $region30: #{mobilenet_block.5} parent=5 // pred_check_branch
      %163 = sbr.rel (%p160) target = $region32
    $region31: #{mobilenet_block.5} parent=5 // pred_region
      %s164 = ssub.s32 %s9, 1
      %s165 = smul.u32 8, %s19
      %p166 = scmp.lt.s32.totalorder %s18, 1
      %s167 = scalar_select %p166, %s18, 1
      %p168 = scmp.lt.s32.totalorder %s165, 15
      %s169 = scalar_select %p168, %s165, 15
      %s170 = smul.addr %s169, 2
      %s171 = smul.addr %s167, 32
      %s172 = sadd.s32 %s170, %s171
      %s173 = smul.addr %s172, 4
      %s174 = scalar_lea.vmem %s0, %s173
      %p175 = pneg %p49
      %p176 = pneg %p46
      %p177 = pneg %p70
      %p178 = pneg %p67
      %p179 = pneg %p91
      %p180 = pneg %p88
      %p181 = pneg %p119
      %p182 = pneg %p116
      %s183 = smul.u32 8, %s19
      %p184 = scmp.lt.s32.totalorder %s18, 1
      %s185 = scalar_select %p184, %s18, 1
      %p186 = scmp.lt.s32.totalorder %s183, 15
      %s187 = scalar_select %p186, %s183, 15
      %s188 = smul.addr %s187, 2
      %s189 = smul.addr %s185, 32
      %s190 = sadd.s32 %s188, %s189
      %s191 = smul.addr %s190, 8
      %s192 = scalar_lea.vmem %s3, %s191
      %s193 = smul.u32 8, %s19
      %p194 = scmp.lt.s32.totalorder %s18, 1
      %s195 = scalar_select %p194, %s18, 1
      %p196 = scmp.lt.s32.totalorder %s193, 15
      %s197 = scalar_select %p196, %s193, 15
      %s198 = smul.addr %s197, 2
      %s199 = smul.addr %s195, 32
      %s200 = sadd.s32 %s198, %s199
      %s201 = smul.addr %s200, 4
      %s202 = scalar_lea.vmem %s0, %s201
      %s203 = smul.u32 8, %s19
      %s204 = smul.u32 8, %s19
      %p205 = scmp.lt.s32.totalorder %s18, 1
      %s206 = scalar_select %p205, %s18, 1
      %p207 = scmp.lt.s32.totalorder %s204, 15
      %s208 = scalar_select %p207, %s204, 15
      %s209 = smul.addr %s208, 2
      %s210 = smul.addr %s206, 32
      %s211 = sadd.s32 %s209, %s210
      %s212 = smul.addr %s211, 8
      %s213 = scalar_lea.vmem %s3, %s212
      %s214 = smul.u32 8, %s19
      %v215 = vld [vmem:[%s1] sm:$0x1]
      %v216 = vld [vmem:[%s2] sm:$0x1]
      %v217 = vld [vmem:[%s202] sm:$0xf]
      %v218 = vld [vmem:[%s202 + $0x4] sm:$0xf]
      %v219 = vld [vmem:[%s202 + $0x8] sm:$0xf]
      %v220 = vld [vmem:[%s202 + $0xc] sm:$0xf]
      %v221 = vld [vmem:[%s202 + $0x10] sm:$0xf]
      %v222 = vld [vmem:[%s202 + $0x14] sm:$0xf]
      %v223 = vld [vmem:[%s202 + $0x18] sm:$0xf]
      %v224 = vld [vmem:[%s202 + $0x1c] sm:$0xf]
      %v225 = vld [vmem:[%s202 + $0x20] sm:$0xf]
      %v226 = vld [vmem:[%s202 + $0x24] sm:$0xf]
      %v227 = vld [vmem:[%s202 + $0x28] sm:$0xf]
      %v228 = vld [vmem:[%s202 + $0x2c] sm:$0xf]
      %v229 = vld [vmem:[%s202 + $0x30] sm:$0xf]
      %v230 = vld [vmem:[%s202 + $0x34] sm:$0xf]
      %v231 = vld [vmem:[%s202 + $0x38] sm:$0xf]
      %v232 = vld [vmem:[%s202 + $0x3c] sm:$0xf]
      %v233 = vunpack.c.l.bf16 %v217
      %v234 = vunpack.c.l.bf16 %v218
      %v235 = vunpack.c.l.bf16 %v219
      %v236 = vunpack.c.l.bf16 %v220
      %v237 = vunpack.c.l.bf16 %v221
      %v238 = vunpack.c.l.bf16 %v222
      %v239 = vunpack.c.l.bf16 %v223
      %v240 = vunpack.c.l.bf16 %v224
      %v241 = vunpack.c.l.bf16 %v225
      %v242 = vunpack.c.l.bf16 %v226
      %v243 = vunpack.c.l.bf16 %v227
      %v244 = vunpack.c.l.bf16 %v228
      %v245 = vunpack.c.l.bf16 %v229
      %v246 = vunpack.c.l.bf16 %v230
      %v247 = vunpack.c.l.bf16 %v231
      %v248 = vunpack.c.l.bf16 %v232
      %v250 = vlaneseq
      %v251 = vshrl.u32 %v250, 7
      %v252 = vsub.s32 0, %v251
      %v253 = vrot.slane %v215, %v252
      %v255 = vmul.f32 %v233, %v253
      %v256 = vmul.f32 %v234, %v253
      %v257 = vmul.f32 %v235, %v253
      %v258 = vmul.f32 %v236, %v253
      %v259 = vmul.f32 %v237, %v253
      %v260 = vmul.f32 %v238, %v253
      %v261 = vmul.f32 %v239, %v253
      %v262 = vmul.f32 %v240, %v253
      %v263 = vmul.f32 %v241, %v253
      %v264 = vmul.f32 %v242, %v253
      %v265 = vmul.f32 %v243, %v253
      %v266 = vmul.f32 %v244, %v253
      %v267 = vmul.f32 %v245, %v253
      %v268 = vmul.f32 %v246, %v253
      %v269 = vmul.f32 %v247, %v253
      %v270 = vmul.f32 %v248, %v253
      %v272 = vlaneseq
      %v273 = vshrl.u32 %v272, 7
      %v274 = vsub.s32 0, %v273
      %v275 = vrot.slane %v216, %v274
      %v277 = vadd.f32 %v255, %v275
      %v278 = vadd.f32 %v256, %v275
      %v279 = vadd.f32 %v257, %v275
      %v280 = vadd.f32 %v258, %v275
      %v281 = vadd.f32 %v259, %v275
      %v282 = vadd.f32 %v260, %v275
      %v283 = vadd.f32 %v261, %v275
      %v284 = vadd.f32 %v262, %v275
      %v285 = vadd.f32 %v263, %v275
      %v286 = vadd.f32 %v264, %v275
      %v287 = vadd.f32 %v265, %v275
      %v288 = vadd.f32 %v266, %v275
      %v289 = vadd.f32 %v267, %v275
      %v290 = vadd.f32 %v268, %v275
      %v291 = vadd.f32 %v269, %v275
      %v292 = vadd.f32 %v270, %v275
      %v293 = vmax.f32 %v277, 0.0
      %v294 = vmax.f32 %v278, 0.0
      %v295 = vmax.f32 %v279, 0.0
      %v296 = vmax.f32 %v280, 0.0
      %v297 = vmax.f32 %v281, 0.0
      %v298 = vmax.f32 %v282, 0.0
      %v299 = vmax.f32 %v283, 0.0
      %v300 = vmax.f32 %v284, 0.0
      %v301 = vmax.f32 %v285, 0.0
      %v302 = vmax.f32 %v286, 0.0
      %v303 = vmax.f32 %v287, 0.0
      %v304 = vmax.f32 %v288, 0.0
      %v305 = vmax.f32 %v289, 0.0
      %v306 = vmax.f32 %v290, 0.0
      %v307 = vmax.f32 %v291, 0.0
      %v308 = vmax.f32 %v292, 0.0
      %309 = vst [vmem:[%s213] sm:$0xff] %v293
      %310 = vst [vmem:[%s213 + $0x8] sm:$0xff] %v294
      %311 = vst [vmem:[%s213 + $0x10] sm:$0xff] %v295
      %312 = vst [vmem:[%s213 + $0x18] sm:$0xff] %v296
      %313 = vst [vmem:[%s213 + $0x20] sm:$0xff] %v297
      %314 = vst [vmem:[%s213 + $0x28] sm:$0xff] %v298
      %315 = vst [vmem:[%s213 + $0x30] sm:$0xff] %v299
      %316 = vst [vmem:[%s213 + $0x38] sm:$0xff] %v300
      %317 = vst [vmem:[%s213 + $0x40] sm:$0xff] %v301
      %318 = vst [vmem:[%s213 + $0x48] sm:$0xff] %v302
      %319 = vst [vmem:[%s213 + $0x50] sm:$0xff] %v303
      %320 = vst [vmem:[%s213 + $0x58] sm:$0xff] %v304
      %321 = vst [vmem:[%s213 + $0x60] sm:$0xff] %v305
      %322 = vst [vmem:[%s213 + $0x68] sm:$0xff] %v306
      %323 = vst [vmem:[%s213 + $0x70] sm:$0xff] %v307
      %324 = vst [vmem:[%s213 + $0x78] sm:$0xff] %v308
      %s325 = smul.u32 8, %s19
      %p326 = scmp.lt.s32.totalorder %s18, 1
      %s327 = scalar_select %p326, %s18, 1
      %p328 = scmp.lt.s32.totalorder %s325, 15
      %s329 = scalar_select %p328, %s325, 15
      %s330 = smul.addr %s329, 2
      %s331 = smul.addr %s327, 32
      %s332 = sadd.s32 %s330, %s331
      %s333 = smul.addr %s332, 8
      %s334 = scalar_lea.vmem %s3, %s333
      // Predicated region
      $region33: #{mobilenet_block.5} parent=31 // pred_check
        %p335 = pneg %p116
      $region34: #{mobilenet_block.5} parent=31 // pred_check_branch
        %337 = sbr.rel (%p335) target = $region36
      $region35: #{mobilenet_block.5} parent=31 // pred_region
        %s338 = smul.u32 8, %s19
      $region36: #{mobilenet_block.5} parent=31 // pred_fallthru
        _
    $region32: #{mobilenet_block.5} parent=5 // pred_fallthru
      _
    %p339 = scmp.le.s32.totalorder 2, %s9
    // Predicated region
    $region37: #{mobilenet_block.5} parent=5 // pred_check
      %p340 = pneg %p339
    $region38: #{mobilenet_block.5} parent=5 // pred_check_branch
      %342 = sbr.rel (%p340) target = $region40
    $region39: #{mobilenet_block.5} parent=5 // pred_region
      %s343 = ssub.s32 %s9, 2
      // Predicated region
      $region41: #{mobilenet_block.5} parent=39 // pred_check
        %p344 = pneg %p122
      $region42: #{mobilenet_block.5} parent=39 // pred_check_branch
        %346 = sbr.rel (%p344) target = $region44
      $region43: #{mobilenet_block.5} parent=39 // pred_region
        %s347 = smul.u32 8, %s21
        %p348 = scmp.lt.s32.totalorder %s20, 1
        %s349 = scalar_select %p348, %s20, 1
        %p350 = scmp.lt.s32.totalorder %s347, 15
        %s351 = scalar_select %p350, %s347, 15
        %s352 = smul.addr %s351, 2
        %s353 = smul.addr %s349, 32
        %s354 = sadd.s32 %s352, %s353
        %s355 = smul.addr %s354, 8
        %s356 = scalar_lea.vmem %s3, %s355
      $region44: #{mobilenet_block.5} parent=39 // pred_fallthru
        _
    $region40: #{mobilenet_block.5} parent=5 // pred_fallthru
      _
  $region6: #{mobilenet_block.5} parent=0 // loop_footer
    %s13 = sadd.s32 1, %s9
  $region7: #{mobilenet_block.5} parent=0 // loop_footer_branch
    %8 = sbr.rel target = $region3
  $region8: #{mobilenet_block.5} parent=0 // loop_exit
    _

// kernel: mobilenet_block.3
$region0: #{mobilenet_block.3}
  #allocation0 [shape = 'u32[]', space=smem, size = 0x4, offset = 0x4, fixed_abs, tag = 'smem constant byte address 0x4 - core index']
  #allocation1 [shape = 'u32[144,128]{1,0:T(1,128)}', space=vmem, size = 0x12000, scoped, tag = 'internal scratch']
  %s0 = inlined_call_operand.vmem [shape: f32[2,2,10,18,128], index: 0, kind: input, shape index: {}]
  %s1 = inlined_call_operand.vmem [shape: f32[9,128], index: 1, kind: input, shape index: {}]
  %s2 = inlined_call_operand.vmem [shape: f32[2,2,2,128], index: 2, kind: output, shape index: {}]
  %s3 = sld [smem:[#allocation0]]
  $region41: #{mobilenet_block.3} parent=0
    _
  %s5 = ssub.s32 1, %s3
  %s6 = scalar_select 0, %s5, %s3
  loop: start=0, step=1, limit=6
  $region2: #{mobilenet_block.3} parent=0 // loop_pre_header
    _
  $region3: #{mobilenet_block.3} parent=0 // loop_header
    %s8 = sphi 0, %s12
    %p9 = scmp.ge.s32.totalorder %s8, 6
    %s15 = sphi 0, %s27
    %s16 = sphi 0, %s23
    %s17 = sphi 0, %s15
    %s18 = sphi 0, %s16
    %s19 = sphi 0, %s17
    %s20 = sphi 0, %s18
    %s32 = sphi 0, %s34
    %s35 = sphi 0, %s32
    %s36 = sphi 0, %s35
    %s52 = sphi 0, %s36
    %s56 = sphi 0, %s56
    %s58 = sphi 0, %s56
    %s59 = sphi 0, %s58
    %s73 = sphi 0, %s59
    %s81 = sphi 0, %s83
    %s84 = sphi 0, %s81
    %s85 = sphi 0, %s84
    %s101 = sphi 0, %s85
  $region4: #{mobilenet_block.3} parent=0 // loop_header_branch
    %11 = sbr.rel (%p9) target = $region8
  $region5: #{mobilenet_block.3} parent=0 // loop_body
    %s13 = ssub.s32 %s8, 1
    %s14 = ssub.s32 %s8, 2
    %s21 = sadd.s32 1, %s16
    %p22 = scmp.ge.s32.totalorder %s21, 2
    %s23 = scalar_select %p22, 0, %s21
    %s24 = sadd.s32 1, %s15
    %s25 = scalar_select %p22, %s24, %s15
    %p26 = scmp.ge.s32.totalorder %s25, 2
    %s27 = scalar_select %p26, 0, %s25
    %s28 = ssub.s32 %s15, %s27
    %s29 = ssub.s32 %s16, %s23
    %s30 = sor.u32 %s28, %s29
    %p31 = scmp.eq.s32.totalorder %s30, 0
    %s33 = sadd.s32 %s32, 1
    %s34 = scalar_select %p31, %s32, %s33
    %p37 = pneg %p31
    %p38 = scmp.eq.s32.totalorder %s8, 3
    %p39 = por %p37, %p38
    %p40 = scmp.ne.s32.totalorder %s32, %s35
    %p41 = scmp.eq.s32.totalorder %s8, 0
    %p42 = por %p40, %p41
    %p43 = scmp.ne.s32.totalorder %s32, %s35
    %p44 = scmp.eq.s32.totalorder %s13, 3
    %p45 = por %p43, %p44
    %p46 = scmp.ne.s32.totalorder %s35, %s36
    %p47 = scmp.eq.s32.totalorder %s13, 0
    %p48 = por %p46, %p47
    %p49 = scmp.ne.s32.totalorder %s35, %s36
    %p50 = scmp.eq.s32.totalorder %s14, 3
    %p51 = por %p49, %p50
    %p53 = scmp.ne.s32.totalorder %s36, %s52
    %p54 = scmp.eq.s32.totalorder %s14, 0
    %p55 = por %p53, %p54
    %s57 = sadd.s32 %s56, 1
    %p60 = scmp.eq.s32.totalorder %s8, 3
    %p61 = scmp.ne.s32.totalorder %s56, %s58
    %p62 = scmp.eq.s32.totalorder %s8, 0
    %p63 = por %p61, %p62
    %p64 = scmp.ne.s32.totalorder %s56, %s58
    %p65 = scmp.eq.s32.totalorder %s13, 3
    %p66 = por %p64, %p65
    %p67 = scmp.ne.s32.totalorder %s58, %s59
    %p68 = scmp.eq.s32.totalorder %s13, 0
    %p69 = por %p67, %p68
    %p70 = scmp.ne.s32.totalorder %s58, %s59
    %p71 = scmp.eq.s32.totalorder %s14, 3
    %p72 = por %p70, %p71
    %p74 = scmp.ne.s32.totalorder %s59, %s73
    %p75 = scmp.eq.s32.totalorder %s14, 0
    %p76 = por %p74, %p75
    %s77 = ssub.s32 %s15, %s27
    %s78 = ssub.s32 %s16, %s23
    %s79 = sor.u32 %s77, %s78
    %p80 = scmp.eq.s32.totalorder %s79, 0
    %s82 = sadd.s32 %s81, 1
    %s83 = scalar_select %p80, %s81, %s82
    %p86 = pneg %p80
    %p87 = scmp.eq.s32.totalorder %s8, 3
    %p88 = por %p86, %p87
    %p89 = scmp.ne.s32.totalorder %s81, %s84
    %p90 = scmp.eq.s32.totalorder %s8, 0
    %p91 = por %p89, %p90
    %p92 = scmp.ne.s32.totalorder %s81, %s84
    %p93 = scmp.eq.s32.totalorder %s13, 3
    %p94 = por %p92, %p93
    %p95 = scmp.ne.s32.totalorder %s84, %s85
    %p96 = scmp.eq.s32.totalorder %s13, 0
    %p97 = por %p95, %p96
    %p98 = scmp.ne.s32.totalorder %s84, %s85
    %p99 = scmp.eq.s32.totalorder %s14, 3
    %p100 = por %p98, %p99
    %p102 = scmp.ne.s32.totalorder %s85, %s101
    %p103 = scmp.eq.s32.totalorder %s14, 0
    %p104 = por %p102, %p103
    %p105 = scmp.le.s32.totalorder 1, %s8
    %p106 = scmp.lt.s32.totalorder %s8, 5
    %p107 = pnand %p105, %p106
    %p108 = pneg %p107
    // Predicated region
    $region9: #{mobilenet_block.3} parent=5 // pred_check
      _
    $region10: #{mobilenet_block.3} parent=5 // pred_check_branch
      %110 = sbr.rel (%p107) target = $region12
    $region11: #{mobilenet_block.3} parent=5 // pred_region
      %s111 = ssub.s32 %s8, 1
      // Predicated region
      $region13: #{mobilenet_block.3} parent=11 // pred_check
        %p112 = pneg %p69
      $region14: #{mobilenet_block.3} parent=11 // pred_check_branch
        %114 = sbr.rel (%p112) target = $region16
      $region15: #{mobilenet_block.3} parent=11 // pred_region
        _
      $region16: #{mobilenet_block.3} parent=11 // pred_fallthru
        _
    $region12: #{mobilenet_block.3} parent=5 // pred_fallthru
      _
    %p115 = scmp.lt.s32.totalorder %s8, 4
    // Predicated region
    $region17: #{mobilenet_block.3} parent=5 // pred_check
      %p116 = pneg %p115
    $region18: #{mobilenet_block.3} parent=5 // pred_check_branch
      %118 = sbr.rel (%p116) target = $region20
    $region19: #{mobilenet_block.3} parent=5 // pred_region
      // Predicated region
      $region21: #{mobilenet_block.3} parent=19 // pred_check
        %p119 = pneg %p42
      $region22: #{mobilenet_block.3} parent=19 // pred_check_branch
        %121 = sbr.rel (%p119) target = $region24
      $region23: #{mobilenet_block.3} parent=19 // pred_region
        %p122 = scmp.lt.s32.totalorder %s15, 1
        %s123 = scalar_select %p122, %s15, 1
        %p124 = scmp.lt.s32.totalorder %s16, 1
        %s125 = scalar_select %p124, %s16, 1
        %s126 = smul.addr %s125, 30
        %s127 = smul.addr %s123, 60
        %s128 = sadd.s32 %s126, %s127
        %s129 = smul.addr %s128, 8
        %s130 = scalar_lea.vmem %s0, %s129
      $region24: #{mobilenet_block.3} parent=19 // pred_fallthru
        _
    $region20: #{mobilenet_block.3} parent=5 // pred_fallthru
      _
    %p131 = scmp.le.s32.totalorder 1, %s8
    %p132 = scmp.lt.s32.totalorder %s8, 5
    %p133 = pnand %p131, %p132
    %p134 = pneg %p133
    // Predicated region
    $region25: #{mobilenet_block.3} parent=5 // pred_check
      _
    $region26: #{mobilenet_block.3} parent=5 // pred_check_branch
      %136 = sbr.rel (%p133) target = $region28
    $region27: #{mobilenet_block.3} parent=5 // pred_region
      %s137 = ssub.s32 %s8, 1
      %p138 = scmp.lt.s32.totalorder %s17, 1
      %s139 = scalar_select %p138, %s17, 1
      %p140 = scmp.lt.s32.totalorder %s18, 1
      %s141 = scalar_select %p140, %s18, 1
      %s142 = smul.addr %s141, 30
      %s143 = smul.addr %s139, 60
      %s144 = sadd.s32 %s142, %s143
      %s145 = smul.addr %s144, 8
      %s146 = scalar_lea.vmem %s0, %s145
      %p147 = pneg %p48
      %p148 = pneg %p45
      %p149 = pneg %p69
      %p150 = pneg %p66
      %p151 = pneg %p97
      %p152 = pneg %p94
      %p153 = scmp.lt.s32.totalorder %s17, 1
      %s154 = scalar_select %p153, %s17, 1
      %p155 = scmp.lt.s32.totalorder %s18, 1
      %s156 = scalar_select %p155, %s18, 1
      %s157 = smul.addr %s154, 2
      %s158 = sadd.s32 %s156, %s157
      %s159 = smul.addr %s158, 2
      %s160 = scalar_lea.vmem %s2, %s159
      %p161 = scmp.lt.s32.totalorder %s17, 1
      %s162 = scalar_select %p161, %s17, 1
      %p163 = scmp.lt.s32.totalorder %s18, 1
      %s164 = scalar_select %p163, %s18, 1
      %s165 = smul.addr %s164, 30
      %s166 = smul.addr %s162, 60
      %s167 = sadd.s32 %s165, %s166
      %s168 = smul.addr %s167, 8
      %s169 = scalar_lea.vmem %s0, %s168
      %p170 = scmp.lt.s32.totalorder %s17, 1
      %s171 = scalar_select %p170, %s17, 1
      %p172 = scmp.lt.s32.totalorder %s18, 1
      %s173 = scalar_select %p172, %s18, 1
      %s174 = smul.addr %s171, 2
      %s175 = sadd.s32 %s173, %s174
      %s176 = smul.addr %s175, 2
      %s177 = scalar_lea.vmem %s2, %s176
      %v178 = vld [vmem:[%s1] sm:$0xff]
      %v179 = vld [vmem:[%s1 + $0x8] sm:$0x1]
      %v180 = vld [vmem:[%s169] sm:$0xff]
      %v181 = vld [vmem:[%s169 + $0x8] sm:$0xff]
      %v182 = vld [vmem:[%s169 + $0x18] sm:$0xff]
      %v183 = vld [vmem:[%s169 + $0x20] sm:$0xff]
      %v184 = vld [vmem:[%s169 + $0x30] sm:$0xff]
      %v185 = vld [vmem:[%s169 + $0x38] sm:$0xff]
      %v186 = vld [vmem:[%s169 + $0x48] sm:$0xff]
      %v187 = vld [vmem:[%s169 + $0x50] sm:$0xff]
      %v188 = vld [vmem:[%s169 + $0x60] sm:$0xff]
      %v189 = vld [vmem:[%s169 + $0x68] sm:$0xff]
      %v190 = vld [vmem:[%s169 + $0x78] sm:$0xff]
      %v191 = vld [vmem:[%s169 + $0x80] sm:$0xff]
      %v192 = vld [vmem:[%s169 + $0x90] sm:$0xff]
      %v193 = vld [vmem:[%s169 + $0x98] sm:$0xff]
      %v194 = vld [vmem:[%s169 + $0xa8] sm:$0xff]
      %v195 = vld [vmem:[%s169 + $0xb0] sm:$0xff]
      %v196 = vlaneseq
      %v197 = vshrl.u32 %v196, 7
      %v198 = vsub.s32 0, %v197
      %v199 = vrot.slane %v178, %v198
      %v200 = vmul.f32 %v180, %v199
      %v201 = vmul.f32 %v181, %v199
      %v202 = vmul.f32 %v182, %v199
      %v203 = vmul.f32 %v183, %v199
      %v204 = vmul.f32 %v184, %v199
      %v205 = vmul.f32 %v185, %v199
      %v206 = vmul.f32 %v186, %v199
      %v207 = vmul.f32 %v187, %v199
      %v208 = vmul.f32 %v188, %v199
      %v209 = vmul.f32 %v189, %v199
      %v210 = vmul.f32 %v190, %v199
      %v211 = vmul.f32 %v191, %v199
      %v212 = vmul.f32 %v192, %v199
      %v213 = vmul.f32 %v193, %v199
      %v214 = vmul.f32 %v194, %v199
      %v215 = vmul.f32 %v195, %v199
      %v216 = vadd.f32 %v200, 0.0
      %v217 = vadd.f32 %v201, 0.0
      %v218 = vadd.f32 %v202, 0.0
      %v219 = vadd.f32 %v203, 0.0
      %v220 = vadd.f32 %v204, 0.0
      %v221 = vadd.f32 %v205, 0.0
      %v222 = vadd.f32 %v206, 0.0
      %v223 = vadd.f32 %v207, 0.0
      %v224 = vadd.f32 %v208, 0.0
      %v225 = vadd.f32 %v209, 0.0
      %v226 = vadd.f32 %v210, 0.0
      %v227 = vadd.f32 %v211, 0.0
      %v228 = vadd.f32 %v212, 0.0
      %v229 = vadd.f32 %v213, 0.0
      %v230 = vadd.f32 %v214, 0.0
      %v231 = vadd.f32 %v215, 0.0
      %v232 = vld [vmem:[%s169 + $0x1] sm:$0xff]
      %v233 = vld [vmem:[%s169 + $0x9] sm:$0xff]
      %v234 = vld [vmem:[%s169 + $0x19] sm:$0xff]
      %v235 = vld [vmem:[%s169 + $0x21] sm:$0xff]
      %v236 = vld [vmem:[%s169 + $0x31] sm:$0xff]
      %v237 = vld [vmem:[%s169 + $0x39] sm:$0xff]
      %v238 = vld [vmem:[%s169 + $0x49] sm:$0xff]
      %v239 = vld [vmem:[%s169 + $0x51] sm:$0xff]
      %v240 = vld [vmem:[%s169 + $0x61] sm:$0xff]
      %v241 = vld [vmem:[%s169 + $0x69] sm:$0xff]
      %v242 = vld [vmem:[%s169 + $0x79] sm:$0xff]
      %v243 = vld [vmem:[%s169 + $0x81] sm:$0xff]
      %v244 = vld [vmem:[%s169 + $0x91] sm:$0xff]
      %v245 = vld [vmem:[%s169 + $0x99] sm:$0xff]
      %v246 = vld [vmem:[%s169 + $0xa9] sm:$0xff]
      %v247 = vld [vmem:[%s169 + $0xb1] sm:$0xff]
      %v248 = vlaneseq
      %v249 = vshrl.u32 %v248, 7
      %v250 = vsub.s32 1, %v249
      %v251 = vrot.slane %v178, %v250
      %v252 = vmul.f32 %v232, %v251
      %v253 = vmul.f32 %v233, %v251
      %v254 = vmul.f32 %v234, %v251
      %v255 = vmul.f32 %v235, %v251
      %v256 = vmul.f32 %v236, %v251
      %v257 = vmul.f32 %v237, %v251
      %v258 = vmul.f32 %v238, %v251
      %v259 = vmul.f32 %v239, %v251
      %v260 = vmul.f32 %v240, %v251
      %v261 = vmul.f32 %v241, %v251
      %v262 = vmul.f32 %v242, %v251
      %v263 = vmul.f32 %v243, %v251
      %v264 = vmul.f32 %v244, %v251
      %v265 = vmul.f32 %v245, %v251
      %v266 = vmul.f32 %v246, %v251
      %v267 = vmul.f32 %v247, %v251
      %v268 = vadd.f32 %v216, %v252
      %v269 = vadd.f32 %v217, %v253
      %v270 = vadd.f32 %v218, %v254
      %v271 = vadd.f32 %v219, %v255
      %v272 = vadd.f32 %v220, %v256
      %v273 = vadd.f32 %v221, %v257
      %v274 = vadd.f32 %v222, %v258
      %v275 = vadd.f32 %v223, %v259
      %v276 = vadd.f32 %v224, %v260
      %v277 = vadd.f32 %v225, %v261
      %v278 = vadd.f32 %v226, %v262
      %v279 = vadd.f32 %v227, %v263
      %v280 = vadd.f32 %v228, %v264
      %v281 = vadd.f32 %v229, %v265
      %v282 = vadd.f32 %v230, %v266
      %v283 = vadd.f32 %v231, %v267
      %v284 = vld [vmem:[%s169 + $0x2] sm:$0xff]
      %v285 = vld [vmem:[%s169 + $0xa] sm:$0xff]
      %v286 = vld [vmem:[%s169 + $0x1a] sm:$0xff]
      %v287 = vld [vmem:[%s169 + $0x22] sm:$0xff]
      %v288 = vld [vmem:[%s169 + $0x32] sm:$0xff]
      %v289 = vld [vmem:[%s169 + $0x3a] sm:$0xff]
      %v290 = vld [vmem:[%s169 + $0x4a] sm:$0xff]
      %v291 = vld [vmem:[%s169 + $0x52] sm:$0xff]
      %v292 = vld [vmem:[%s169 + $0x62] sm:$0xff]
      %v293 = vld [vmem:[%s169 + $0x6a] sm:$0xff]
      %v294 = vld [vmem:[%s169 + $0x7a] sm:$0xff]
      %v295 = vld [vmem:[%s169 + $0x82] sm:$0xff]
      %v296 = vld [vmem:[%s169 + $0x92] sm:$0xff]
      %v297 = vld [vmem:[%s169 + $0x9a] sm:$0xff]
      %v298 = vld [vmem:[%s169 + $0xaa] sm:$0xff]
      %v299 = vld [vmem:[%s169 + $0xb2] sm:$0xff]
      %v300 = vlaneseq
      %v301 = vshrl.u32 %v300, 7
      %v302 = vsub.s32 2, %v301
      %v303 = vrot.slane %v178, %v302
      %v304 = vmul.f32 %v284, %v303
      %v305 = vmul.f32 %v285, %v303
      %v306 = vmul.f32 %v286, %v303
      %v307 = vmul.f32 %v287, %v303
      %v308 = vmul.f32 %v288, %v303
      %v309 = vmul.f32 %v289, %v303
      %v310 = vmul.f32 %v290, %v303
      %v311 = vmul.f32 %v291, %v303
      %v312 = vmul.f32 %v292, %v303
      %v313 = vmul.f32 %v293, %v303
      %v314 = vmul.f32 %v294, %v303
      %v315 = vmul.f32 %v295, %v303
      %v316 = vmul.f32 %v296, %v303
      %v317 = vmul.f32 %v297, %v303
      %v318 = vmul.f32 %v298, %v303
      %v319 = vmul.f32 %v299, %v303
      %v320 = vadd.f32 %v268, %v304
      %v321 = vadd.f32 %v269, %v305
      %v322 = vadd.f32 %v270, %v306
      %v323 = vadd.f32 %v271, %v307
      %v324 = vadd.f32 %v272, %v308
      %v325 = vadd.f32 %v273, %v309
      %v326 = vadd.f32 %v274, %v310
      %v327 = vadd.f32 %v275, %v311
      %v328 = vadd.f32 %v276, %v312
      %v329 = vadd.f32 %v277, %v313
      %v330 = vadd.f32 %v278, %v314
      %v331 = vadd.f32 %v279, %v315
      %v332 = vadd.f32 %v280, %v316
      %v333 = vadd.f32 %v281, %v317
      %v334 = vadd.f32 %v282, %v318
      %v335 = vadd.f32 %v283, %v319
      %s336 = scalar_lea.vmem %s169, 24
      %v337 = vld [vmem:[%s336] sm:$0xff]
      %v338 = vld [vmem:[%s336 + $0x8] sm:$0xff]
      %v339 = vld [vmem:[%s336 + $0x18] sm:$0xff]
      %v340 = vld [vmem:[%s336 + $0x20] sm:$0xff]
      %v341 = vld [vmem:[%s336 + $0x30] sm:$0xff]
      %v342 = vld [vmem:[%s336 + $0x38] sm:$0xff]
      %v343 = vld [vmem:[%s336 + $0x48] sm:$0xff]
      %v344 = vld [vmem:[%s336 + $0x50] sm:$0xff]
      %v345 = vld [vmem:[%s336 + $0x60] sm:$0xff]
      %v346 = vld [vmem:[%s336 + $0x68] sm:$0xff]
      %v347 = vld [vmem:[%s336 + $0x78] sm:$0xff]
      %v348 = vld [vmem:[%s336 + $0x80] sm:$0xff]
      %v349 = vld [vmem:[%s336 + $0x90] sm:$0xff]
      %v350 = vld [vmem:[%s336 + $0x98] sm:$0xff]
      %v351 = vld [vmem:[%s336 + $0xa8] sm:$0xff]
      %v352 = vld [vmem:[%s336 + $0xb0] sm:$0xff]
      %v353 = vlaneseq
      %v354 = vshrl.u32 %v353, 7
      %v355 = vsub.s32 3, %v354
      %v356 = vrot.slane %v178, %v355
      %v357 = vmul.f32 %v337, %v356
      %v358 = vmul.f32 %v338, %v356
      %v359 = vmul.f32 %v339, %v356
      %v360 = vmul.f32 %v340, %v356
      %v361 = vmul.f32 %v341, %v356
      %v362 = vmul.f32 %v342, %v356
      %v363 = vmul.f32 %v343, %v356
      %v364 = vmul.f32 %v344, %v356
      %v365 = vmul.f32 %v345, %v356
      %v366 = vmul.f32 %v346, %v356
      %v367 = vmul.f32 %v347, %v356
      %v368 = vmul.f32 %v348, %v356
      %v369 = vmul.f32 %v349, %v356
      %v370 = vmul.f32 %v350, %v356
      %v371 = vmul.f32 %v351, %v356
      %v372 = vmul.f32 %v352, %v356
      %v373 = vadd.f32 %v320, %v357
      %v374 = vadd.f32 %v321, %v358
      %v375 = vadd.f32 %v322, %v359
      %v376 = vadd.f32 %v323, %v360
      %v377 = vadd.f32 %v324, %v361
      %v378 = vadd.f32 %v325, %v362
      %v379 = vadd.f32 %v326, %v363
      %v380 = vadd.f32 %v327, %v364
      %v381 = vadd.f32 %v328, %v365
      %v382 = vadd.f32 %v329, %v366
      %v383 = vadd.f32 %v330, %v367
      %v384 = vadd.f32 %v331, %v368
      %v385 = vadd.f32 %v332, %v369
      %v386 = vadd.f32 %v333, %v370
      %v387 = vadd.f32 %v334, %v371
      %v388 = vadd.f32 %v335, %v372
      %v389 = vld [vmem:[%s336 + $0x1] sm:$0xff]
      %v390 = vld [vmem:[%s336 + $0x9] sm:$0xff]
      %v391 = vld [vmem:[%s336 + $0x19] sm:$0xff]
      %v392 = vld [vmem:[%s336 + $0x21] sm:$0xff]
      %v393 = vld [vmem:[%s336 + $0x31] sm:$0xff]
      %v394 = vld [vmem:[%s336 + $0x39] sm:$0xff]
      %v395 = vld [vmem:[%s336 + $0x49] sm:$0xff]
      %v396 = vld [vmem:[%s336 + $0x51] sm:$0xff]
      %v397 = vld [vmem:[%s336 + $0x61] sm:$0xff]
      %v398 = vld [vmem:[%s336 + $0x69] sm:$0xff]
      %v399 = vld [vmem:[%s336 + $0x79] sm:$0xff]
      %v400 = vld [vmem:[%s336 + $0x81] sm:$0xff]
      %v401 = vld [vmem:[%s336 + $0x91] sm:$0xff]
      %v402 = vld [vmem:[%s336 + $0x99] sm:$0xff]
      %v403 = vld [vmem:[%s336 + $0xa9] sm:$0xff]
      %v404 = vld [vmem:[%s336 + $0xb1] sm:$0xff]
      %v405 = vlaneseq
      %v406 = vshrl.u32 %v405, 7
      %v407 = vsub.s32 4, %v406
      %v408 = vrot.slane %v178, %v407
      %v409 = vmul.f32 %v389, %v408
      %v410 = vmul.f32 %v390, %v408
      %v411 = vmul.f32 %v391, %v408
      %v412 = vmul.f32 %v392, %v408
      %v413 = vmul.f32 %v393, %v408
      %v414 = vmul.f32 %v394, %v408
      %v415 = vmul.f32 %v395, %v408
      %v416 = vmul.f32 %v396, %v408
      %v417 = vmul.f32 %v397, %v408
      %v418 = vmul.f32 %v398, %v408
      %v419 = vmul.f32 %v399, %v408
      %v420 = vmul.f32 %v400, %v408
      %v421 = vmul.f32 %v401, %v408
      %v422 = vmul.f32 %v402, %v408
      %v423 = vmul.f32 %v403, %v408
      %v424 = vmul.f32 %v404, %v408
      %v425 = vadd.f32 %v373, %v409
      %v426 = vadd.f32 %v374, %v410
      %v427 = vadd.f32 %v375, %v411
      %v428 = vadd.f32 %v376, %v412
      %v429 = vadd.f32 %v377, %v413
      %v430 = vadd.f32 %v378, %v414
      %v431 = vadd.f32 %v379, %v415
      %v432 = vadd.f32 %v380, %v416
      %v433 = vadd.f32 %v381, %v417
      %v434 = vadd.f32 %v382, %v418
      %v435 = vadd.f32 %v383, %v419
      %v436 = vadd.f32 %v384, %v420
      %v437 = vadd.f32 %v385, %v421
      %v438 = vadd.f32 %v386, %v422
      %v439 = vadd.f32 %v387, %v423
      %v440 = vadd.f32 %v388, %v424
      %v441 = vld [vmem:[%s336 + $0x2] sm:$0xff]
      %v442 = vld [vmem:[%s336 + $0xa] sm:$0xff]
      %v443 = vld [vmem:[%s336 + $0x1a] sm:$0xff]
      %v444 = vld [vmem:[%s336 + $0x22] sm:$0xff]
      %v445 = vld [vmem:[%s336 + $0x32] sm:$0xff]
      %v446 = vld [vmem:[%s336 + $0x3a] sm:$0xff]
      %v447 = vld [vmem:[%s336 + $0x4a] sm:$0xff]
      %v448 = vld [vmem:[%s336 + $0x52] sm:$0xff]
      %v449 = vld [vmem:[%s336 + $0x62] sm:$0xff]
      %v450 = vld [vmem:[%s336 + $0x6a] sm:$0xff]
      %v451 = vld [vmem:[%s336 + $0x7a] sm:$0xff]
      %v452 = vld [vmem:[%s336 + $0x82] sm:$0xff]
      %v453 = vld [vmem:[%s336 + $0x92] sm:$0xff]
      %v454 = vld [vmem:[%s336 + $0x9a] sm:$0xff]
      %v455 = vld [vmem:[%s336 + $0xaa] sm:$0xff]
      %v456 = vld [vmem:[%s336 + $0xb2] sm:$0xff]
      %v457 = vlaneseq
      %v458 = vshrl.u32 %v457, 7
      %v459 = vsub.s32 5, %v458
      %v460 = vrot.slane %v178, %v459
      %v461 = vmul.f32 %v441, %v460
      %v462 = vmul.f32 %v442, %v460
      %v463 = vmul.f32 %v443, %v460
      %v464 = vmul.f32 %v444, %v460
      %v465 = vmul.f32 %v445, %v460
      %v466 = vmul.f32 %v446, %v460
      %v467 = vmul.f32 %v447, %v460
      %v468 = vmul.f32 %v448, %v460
      %v469 = vmul.f32 %v449, %v460
      %v470 = vmul.f32 %v450, %v460
      %v471 = vmul.f32 %v451, %v460
      %v472 = vmul.f32 %v452, %v460
      %v473 = vmul.f32 %v453, %v460
      %v474 = vmul.f32 %v454, %v460
      %v475 = vmul.f32 %v455, %v460
      %v476 = vmul.f32 %v456, %v460
      %v477 = vadd.f32 %v425, %v461
      %v478 = vadd.f32 %v426, %v462
      %v479 = vadd.f32 %v427, %v463
      %v480 = vadd.f32 %v428, %v464
      %v481 = vadd.f32 %v429, %v465
      %v482 = vadd.f32 %v430, %v466
      %v483 = vadd.f32 %v431, %v467
      %v484 = vadd.f32 %v432, %v468
      %v485 = vadd.f32 %v433, %v469
      %v486 = vadd.f32 %v434, %v470
      %v487 = vadd.f32 %v435, %v471
      %v488 = vadd.f32 %v436, %v472
      %v489 = vadd.f32 %v437, %v473
      %v490 = vadd.f32 %v438, %v474
      %v491 = vadd.f32 %v439, %v475
      %v492 = vadd.f32 %v440, %v476
      %s493 = scalar_lea.vmem %s169, 48
      %v494 = vld [vmem:[%s493] sm:$0xff]
      %v495 = vld [vmem:[%s493 + $0x8] sm:$0xff]
      %v496 = vld [vmem:[%s493 + $0x18] sm:$0xff]
      %v497 = vld [vmem:[%s493 + $0x20] sm:$0xff]
      %v498 = vld [vmem:[%s493 + $0x30] sm:$0xff]
      %v499 = vld [vmem:[%s493 + $0x38] sm:$0xff]
      %v500 = vld [vmem:[%s493 + $0x48] sm:$0xff]
      %v501 = vld [vmem:[%s493 + $0x50] sm:$0xff]
      %v502 = vld [vmem:[%s493 + $0x60] sm:$0xff]
      %v503 = vld [vmem:[%s493 + $0x68] sm:$0xff]
      %v504 = vld [vmem:[%s493 + $0x78] sm:$0xff]
      %v505 = vld [vmem:[%s493 + $0x80] sm:$0xff]
      %v506 = vld [vmem:[%s493 + $0x90] sm:$0xff]
      %v507 = vld [vmem:[%s493 + $0x98] sm:$0xff]
      %v508 = vld [vmem:[%s493 + $0xa8] sm:$0xff]
      %v509 = vld [vmem:[%s493 + $0xb0] sm:$0xff]
      %v510 = vlaneseq
      %v511 = vshrl.u32 %v510, 7
      %v512 = vsub.s32 6, %v511
      %v513 = vrot.slane %v178, %v512
      %v514 = vmul.f32 %v494, %v513
      %v515 = vmul.f32 %v495, %v513
      %v516 = vmul.f32 %v496, %v513
      %v517 = vmul.f32 %v497, %v513
      %v518 = vmul.f32 %v498, %v513
      %v519 = vmul.f32 %v499, %v513
      %v520 = vmul.f32 %v500, %v513
      %v521 = vmul.f32 %v501, %v513
      %v522 = vmul.f32 %v502, %v513
      %v523 = vmul.f32 %v503, %v513
      %v524 = vmul.f32 %v504, %v513
      %v525 = vmul.f32 %v505, %v513
      %v526 = vmul.f32 %v506, %v513
      %v527 = vmul.f32 %v507, %v513
      %v528 = vmul.f32 %v508, %v513
      %v529 = vmul.f32 %v509, %v513
      %v530 = vadd.f32 %v477, %v514
      %v531 = vadd.f32 %v478, %v515
      %v532 = vadd.f32 %v479, %v516
      %v533 = vadd.f32 %v480, %v517
      %v534 = vadd.f32 %v481, %v518
      %v535 = vadd.f32 %v482, %v519
      %v536 = vadd.f32 %v483, %v520
      %v537 = vadd.f32 %v484, %v521
      %v538 = vadd.f32 %v485, %v522
      %v539 = vadd.f32 %v486, %v523
      %v540 = vadd.f32 %v487, %v524
      %v541 = vadd.f32 %v488, %v525
      %v542 = vadd.f32 %v489, %v526
      %v543 = vadd.f32 %v490, %v527
      %v544 = vadd.f32 %v491, %v528
      %v545 = vadd.f32 %v492, %v529
      %v546 = vld [vmem:[%s493 + $0x1] sm:$0xff]
      %v547 = vld [vmem:[%s493 + $0x9] sm:$0xff]
      %v548 = vld [vmem:[%s493 + $0x19] sm:$0xff]
      %v549 = vld [vmem:[%s493 + $0x21] sm:$0xff]
      %v550 = vld [vmem:[%s493 + $0x31] sm:$0xff]
      %v551 = vld [vmem:[%s493 + $0x39] sm:$0xff]
      %v552 = vld [vmem:[%s493 + $0x49] sm:$0xff]
      %v553 = vld [vmem:[%s493 + $0x51] sm:$0xff]
      %v554 = vld [vmem:[%s493 + $0x61] sm:$0xff]
      %v555 = vld [vmem:[%s493 + $0x69] sm:$0xff]
      %v556 = vld [vmem:[%s493 + $0x79] sm:$0xff]
      %v557 = vld [vmem:[%s493 + $0x81] sm:$0xff]
      %v558 = vld [vmem:[%s493 + $0x91] sm:$0xff]
      %v559 = vld [vmem:[%s493 + $0x99] sm:$0xff]
      %v560 = vld [vmem:[%s493 + $0xa9] sm:$0xff]
      %v561 = vld [vmem:[%s493 + $0xb1] sm:$0xff]
      %v562 = vlaneseq
      %v563 = vshrl.u32 %v562, 7
      %v564 = vsub.s32 7, %v563
      %v565 = vrot.slane %v178, %v564
      %v566 = vmul.f32 %v546, %v565
      %v567 = vmul.f32 %v547, %v565
      %v568 = vmul.f32 %v548, %v565
      %v569 = vmul.f32 %v549, %v565
      %v570 = vmul.f32 %v550, %v565
      %v571 = vmul.f32 %v551, %v565
      %v572 = vmul.f32 %v552, %v565
      %v573 = vmul.f32 %v553, %v565
      %v574 = vmul.f32 %v554, %v565
      %v575 = vmul.f32 %v555, %v565
      %v576 = vmul.f32 %v556, %v565
      %v577 = vmul.f32 %v557, %v565
      %v578 = vmul.f32 %v558, %v565
      %v579 = vmul.f32 %v559, %v565
      %v580 = vmul.f32 %v560, %v565
      %v581 = vmul.f32 %v561, %v565
      %v582 = vadd.f32 %v530, %v566
      %v583 = vadd.f32 %v531, %v567
      %v584 = vadd.f32 %v532, %v568
      %v585 = vadd.f32 %v533, %v569
      %v586 = vadd.f32 %v534, %v570
      %v587 = vadd.f32 %v535, %v571
      %v588 = vadd.f32 %v536, %v572
      %v589 = vadd.f32 %v537, %v573
      %v590 = vadd.f32 %v538, %v574
      %v591 = vadd.f32 %v539, %v575
      %v592 = vadd.f32 %v540, %v576
      %v593 = vadd.f32 %v541, %v577
      %v594 = vadd.f32 %v542, %v578
      %v595 = vadd.f32 %v543, %v579
      %v596 = vadd.f32 %v544, %v580
      %v597 = vadd.f32 %v545, %v581
      %v598 = vld [vmem:[%s493 + $0x2] sm:$0xff]
      %v599 = vld [vmem:[%s493 + $0xa] sm:$0xff]
      %v600 = vld [vmem:[%s493 + $0x1a] sm:$0xff]
      %v601 = vld [vmem:[%s493 + $0x22] sm:$0xff]
      %v602 = vld [vmem:[%s493 + $0x32] sm:$0xff]
      %v603 = vld [vmem:[%s493 + $0x3a] sm:$0xff]
      %v604 = vld [vmem:[%s493 + $0x4a] sm:$0xff]
      %v605 = vld [vmem:[%s493 + $0x52] sm:$0xff]
      %v606 = vld [vmem:[%s493 + $0x62] sm:$0xff]
      %v607 = vld [vmem:[%s493 + $0x6a] sm:$0xff]
      %v608 = vld [vmem:[%s493 + $0x7a] sm:$0xff]
      %v609 = vld [vmem:[%s493 + $0x82] sm:$0xff]
      %v610 = vld [vmem:[%s493 + $0x92] sm:$0xff]
      %v611 = vld [vmem:[%s493 + $0x9a] sm:$0xff]
      %v612 = vld [vmem:[%s493 + $0xaa] sm:$0xff]
      %v613 = vld [vmem:[%s493 + $0xb2] sm:$0xff]
      %v614 = vlaneseq
      %v615 = vshrl.u32 %v614, 7
      %v616 = vsub.s32 0, %v615
      %v617 = vrot.slane %v179, %v616
      %v618 = vmul.f32 %v598, %v617
      %v619 = vmul.f32 %v599, %v617
      %v620 = vmul.f32 %v600, %v617
      %v621 = vmul.f32 %v601, %v617
      %v622 = vmul.f32 %v602, %v617
      %v623 = vmul.f32 %v603, %v617
      %v624 = vmul.f32 %v604, %v617
      %v625 = vmul.f32 %v605, %v617
      %v626 = vmul.f32 %v606, %v617
      %v627 = vmul.f32 %v607, %v617
      %v628 = vmul.f32 %v608, %v617
      %v629 = vmul.f32 %v609, %v617
      %v630 = vmul.f32 %v610, %v617
      %v631 = vmul.f32 %v611, %v617
      %v632 = vmul.f32 %v612, %v617
      %v633 = vmul.f32 %v613, %v617
      %v634 = vadd.f32 %v582, %v618
      %v635 = vadd.f32 %v583, %v619
      %v636 = vadd.f32 %v584, %v620
      %v637 = vadd.f32 %v585, %v621
      %v638 = vadd.f32 %v586, %v622
      %v639 = vadd.f32 %v587, %v623
      %v640 = vadd.f32 %v588, %v624
      %v641 = vadd.f32 %v589, %v625
      %v642 = vadd.f32 %v590, %v626
      %v643 = vadd.f32 %v591, %v627
      %v644 = vadd.f32 %v592, %v628
      %v645 = vadd.f32 %v593, %v629
      %v646 = vadd.f32 %v594, %v630
      %v647 = vadd.f32 %v595, %v631
      %v648 = vadd.f32 %v596, %v632
      %v649 = vadd.f32 %v597, %v633
      %v650 = vadd.f32 %v634, %v635
      %v651 = vadd.f32 %v650, %v636
      %v652 = vadd.f32 %v651, %v637
      %v653 = vadd.f32 %v652, %v638
      %v654 = vadd.f32 %v653, %v639
      %v655 = vadd.f32 %v654, %v640
      %v656 = vadd.f32 %v655, %v641
      %v657 = vadd.f32 %v656, %v642
      %v658 = vadd.f32 %v657, %v643
      %v659 = vadd.f32 %v658, %v644
      %v660 = vadd.f32 %v659, %v645
      %v661 = vadd.f32 %v660, %v646
      %v662 = vadd.f32 %v661, %v647
      %v663 = vadd.f32 %v662, %v648
      %v664 = vadd.f32 %v663, %v649
      %v665 = vrot.slane %v664, 4
      %v666 = vadd.f32 %v664, %v665
      %v667 = vrot.slane %v666, 2
      %v668 = vadd.f32 %v666, %v667
      %v669 = vrot.slane %v668, 1
      %v670 = vadd.f32 %v668, %v669
      %v671 = vmul.f32 %v634, %v634
      %v672 = vmul.f32 %v635, %v635
      %v673 = vmul.f32 %v636, %v636
      %v674 = vmul.f32 %v637, %v637
      %v675 = vmul.f32 %v638, %v638
      %v676 = vmul.f32 %v639, %v639
      %v677 = vmul.f32 %v640, %v640
      %v678 = vmul.f32 %v641, %v641
      %v679 = vmul.f32 %v642, %v642
      %v680 = vmul.f32 %v643, %v643
      %v681 = vmul.f32 %v644, %v644
      %v682 = vmul.f32 %v645, %v645
      %v683 = vmul.f32 %v646, %v646
      %v684 = vmul.f32 %v647, %v647
      %v685 = vmul.f32 %v648, %v648
      %v686 = vmul.f32 %v649, %v649
      %v687 = vadd.f32 %v671, %v672
      %v688 = vadd.f32 %v687, %v673
      %v689 = vadd.f32 %v688, %v674
      %v690 = vadd.f32 %v689, %v675
      %v691 = vadd.f32 %v690, %v676
      %v692 = vadd.f32 %v691, %v677
      %v693 = vadd.f32 %v692, %v678
      %v694 = vadd.f32 %v693, %v679
      %v695 = vadd.f32 %v694, %v680
      %v696 = vadd.f32 %v695, %v681
      %v697 = vadd.f32 %v696, %v682
      %v698 = vadd.f32 %v697, %v683
      %v699 = vadd.f32 %v698, %v684
      %v700 = vadd.f32 %v699, %v685
      %v701 = vadd.f32 %v700, %v686
      %v702 = vrot.slane %v701, 4
      %v703 = vadd.f32 %v701, %v702
      %v704 = vrot.slane %v703, 2
      %v705 = vadd.f32 %v703, %v704
      %v706 = vrot.slane %v705, 1
      %v707 = vadd.f32 %v705, %v706
      %vm708 = vcmask 1040384
      %v709 = vsel %vm708, %v670, %v707
      %710 = vst [vmem:[%s177] sm:$0x3] %v709
      %p711 = scmp.lt.s32.totalorder %s17, 1
      %s712 = scalar_select %p711, %s17, 1
      %p713 = scmp.lt.s32.totalorder %s18, 1
      %s714 = scalar_select %p713, %s18, 1
      %s715 = smul.addr %s712, 2
      %s716 = sadd.s32 %s714, %s715
      %s717 = smul.addr %s716, 2
      %s718 = scalar_lea.vmem %s2, %s717
      // Predicated region
      $region29: #{mobilenet_block.3} parent=27 // pred_check
        %p719 = pneg %p94
      $region30: #{mobilenet_block.3} parent=27 // pred_check_branch
        %721 = sbr.rel (%p719) target = $region32
      $region31: #{mobilenet_block.3} parent=27 // pred_region
        _
      $region32: #{mobilenet_block.3} parent=27 // pred_fallthru
        _
    $region28: #{mobilenet_block.3} parent=5 // pred_fallthru
      _
    %p722 = scmp.le.s32.totalorder 2, %s8
    // Predicated region
    $region33: #{mobilenet_block.3} parent=5 // pred_check
      %p723 = pneg %p722
    $region34: #{mobilenet_block.3} parent=5 // pred_check_branch
      %725 = sbr.rel (%p723) target = $region36
    $region35: #{mobilenet_block.3} parent=5 // pred_region
      %s726 = ssub.s32 %s8, 2
      // Predicated region
      $region37: #{mobilenet_block.3} parent=35 // pred_check
        %p727 = pneg %p100
      $region38: #{mobilenet_block.3} parent=35 // pred_check_branch
        %729 = sbr.rel (%p727) target = $region40
      $region39: #{mobilenet_block.3} parent=35 // pred_region
        %p730 = scmp.lt.s32.totalorder %s19, 1
        %s731 = scalar_select %p730, %s19, 1
        %p732 = scmp.lt.s32.totalorder %s20, 1
        %s733 = scalar_select %p732, %s20, 1
        %s734 = smul.addr %s731, 2
        %s735 = sadd.s32 %s733, %s734
        %s736 = smul.addr %s735, 2
        %s737 = scalar_lea.vmem %s2, %s736
      $region40: #{mobilenet_block.3} parent=35 // pred_fallthru
        _
    $region36: #{mobilenet_block.3} parent=5 // pred_fallthru
      _
  $region6: #{mobilenet_block.3} parent=0 // loop_footer
    %s12 = sadd.s32 1, %s8
  $region7: #{mobilenet_block.3} parent=0 // loop_footer_branch
    %7 = sbr.rel target = $region3
  $region8: #{mobilenet_block.3} parent=0 // loop_exit
    _

// kernel: mobilenet_block.4
$region0: #{mobilenet_block.4}
  #allocation0 [shape = 'u32[]', space=smem, size = 0x4, offset = 0x4, fixed_abs, tag = 'smem constant byte address 0x4 - core index']
  #allocation1 [shape = 'u32[144,128]{1,0:T(1,128)}', space=vmem, size = 0x12000, scoped, tag = 'internal scratch']
  %s0 = inlined_call_operand.vmem [shape: f32[2,2,10,18,128], index: 0, kind: input, shape index: {}]
  %s1 = inlined_call_operand.vmem [shape: f32[9,128], index: 1, kind: input, shape index: {}]
  %s2 = inlined_call_operand.vmem [shape: f32[1,128], index: 2, kind: input, shape index: {}]
  %s3 = inlined_call_operand.vmem [shape: f32[1,128], index: 3, kind: input, shape index: {}]
  %s4 = inlined_call_operand.vmem [shape: bf16[128,128], index: 4, kind: input, shape index: {}]
  %s5 = inlined_call_operand.vmem [shape: bf16[2,16,16,128], index: 5, kind: output, shape index: {0}]
  %s6 = inlined_call_operand.vmem [shape: f32[2,2,2,128], index: 6, kind: output, shape index: {1}]
  %7 = xla_tuple %s5, %s6
  %s8 = sld [smem:[#allocation0]]
  $region61: #{mobilenet_block.4} parent=0
    _
  %s10 = ssub.s32 1, %s8
  %s11 = scalar_select 0, %s10, %s8
  loop: start=0, step=1, limit=6
  $region2: #{mobilenet_block.4} parent=0 // loop_pre_header
    _
  $region3: #{mobilenet_block.4} parent=0 // loop_header
    %s13 = sphi 0, %s17
    %p14 = scmp.ge.s32.totalorder %s13, 6
    %s20 = sphi 0, %s32
    %s21 = sphi 0, %s28
    %s22 = sphi 0, %s20
    %s23 = sphi 0, %s21
    %s24 = sphi 0, %s22
    %s25 = sphi 0, %s23
    %s37 = sphi 0, %s39
    %s40 = sphi 0, %s37
    %s41 = sphi 0, %s40
    %s57 = sphi 0, %s41
    %s61 = sphi 0, %s61
    %s63 = sphi 0, %s61
    %s64 = sphi 0, %s63
    %s78 = sphi 0, %s64
    %s82 = sphi 0, %s82
    %s84 = sphi 0, %s82
    %s85 = sphi 0, %s84
    %s99 = sphi 0, %s85
    %s103 = sphi 0, %s103
    %s105 = sphi 0, %s103
    %s106 = sphi 0, %s105
    %s120 = sphi 0, %s106
    %s124 = sphi 0, %s124
    %s126 = sphi 0, %s124
    %s127 = sphi 0, %s126
    %s141 = sphi 0, %s127
    %s149 = sphi 0, %s151
    %s152 = sphi 0, %s149
    %s153 = sphi 0, %s152
    %s169 = sphi 0, %s153
    %s177 = sphi 0, %s179
    %s180 = sphi 0, %s177
    %s181 = sphi 0, %s180
    %s197 = sphi 0, %s181
  $region4: #{mobilenet_block.4} parent=0 // loop_header_branch
    %16 = sbr.rel (%p14) target = $region8
  $region5: #{mobilenet_block.4} parent=0 // loop_body
    %s18 = ssub.s32 %s13, 1
    %s19 = ssub.s32 %s13, 2
    %s26 = sadd.s32 1, %s21
    %p27 = scmp.ge.s32.totalorder %s26, 2
    %s28 = scalar_select %p27, 0, %s26
    %s29 = sadd.s32 1, %s20
    %s30 = scalar_select %p27, %s29, %s20
    %p31 = scmp.ge.s32.totalorder %s30, 2
    %s32 = scalar_select %p31, 0, %s30
    %s33 = ssub.s32 %s20, %s32
    %s34 = ssub.s32 %s21, %s28
    %s35 = sor.u32 %s33, %s34
    %p36 = scmp.eq.s32.totalorder %s35, 0
    %s38 = sadd.s32 %s37, 1
    %s39 = scalar_select %p36, %s37, %s38
    %p42 = pneg %p36
    %p43 = scmp.eq.s32.totalorder %s13, 3
    %p44 = por %p42, %p43
    %p45 = scmp.ne.s32.totalorder %s37, %s40
    %p46 = scmp.eq.s32.totalorder %s13, 0
    %p47 = por %p45, %p46
    %p48 = scmp.ne.s32.totalorder %s37, %s40
    %p49 = scmp.eq.s32.totalorder %s18, 3
    %p50 = por %p48, %p49
    %p51 = scmp.ne.s32.totalorder %s40, %s41
    %p52 = scmp.eq.s32.totalorder %s18, 0
    %p53 = por %p51, %p52
    %p54 = scmp.ne.s32.totalorder %s40, %s41
    %p55 = scmp.eq.s32.totalorder %s19, 3
    %p56 = por %p54, %p55
    %p58 = scmp.ne.s32.totalorder %s41, %s57
    %p59 = scmp.eq.s32.totalorder %s19, 0
    %p60 = por %p58, %p59
    %s62 = sadd.s32 %s61, 1
    %p65 = scmp.eq.s32.totalorder %s13, 3
    %p66 = scmp.ne.s32.totalorder %s61, %s63
    %p67 = scmp.eq.s32.totalorder %s13, 0
    %p68 = por %p66, %p67
    %p69 = scmp.ne.s32.totalorder %s61, %s63
    %p70 = scmp.eq.s32.totalorder %s18, 3
    %p71 = por %p69, %p70
    %p72 = scmp.ne.s32.totalorder %s63, %s64
    %p73 = scmp.eq.s32.totalorder %s18, 0
    %p74 = por %p72, %p73
    %p75 = scmp.ne.s32.totalorder %s63, %s64
    %p76 = scmp.eq.s32.totalorder %s19, 3
    %p77 = por %p75, %p76
    %p79 = scmp.ne.s32.totalorder %s64, %s78
    %p80 = scmp.eq.s32.totalorder %s19, 0
    %p81 = por %p79, %p80
    %s83 = sadd.s32 %s82, 1
    %p86 = scmp.eq.s32.totalorder %s13, 3
    %p87 = scmp.ne.s32.totalorder %s82, %s84
    %p88 = scmp.eq.s32.totalorder %s13, 0
    %p89 = por %p87, %p88
    %p90 = scmp.ne.s32.totalorder %s82, %s84
    %p91 = scmp.eq.s32.totalorder %s18, 3
    %p92 = por %p90, %p91
    %p93 = scmp.ne.s32.totalorder %s84, %s85
    %p94 = scmp.eq.s32.totalorder %s18, 0
    %p95 = por %p93, %p94
    %p96 = scmp.ne.s32.totalorder %s84, %s85
    %p97 = scmp.eq.s32.totalorder %s19, 3
    %p98 = por %p96, %p97
    %p100 = scmp.ne.s32.totalorder %s85, %s99
    %p101 = scmp.eq.s32.totalorder %s19, 0
    %p102 = por %p100, %p101
    %s104 = sadd.s32 %s103, 1
    %p107 = scmp.eq.s32.totalorder %s13, 3
    %p108 = scmp.ne.s32.totalorder %s103, %s105
    %p109 = scmp.eq.s32.totalorder %s13, 0
    %p110 = por %p108, %p109
    %p111 = scmp.ne.s32.totalorder %s103, %s105
    %p112 = scmp.eq.s32.totalorder %s18, 3
    %p113 = por %p111, %p112
    %p114 = scmp.ne.s32.totalorder %s105, %s106
    %p115 = scmp.eq.s32.totalorder %s18, 0
    %p116 = por %p114, %p115
    %p117 = scmp.ne.s32.totalorder %s105, %s106
    %p118 = scmp.eq.s32.totalorder %s19, 3
    %p119 = por %p117, %p118
    %p121 = scmp.ne.s32.totalorder %s106, %s120
    %p122 = scmp.eq.s32.totalorder %s19, 0
    %p123 = por %p121, %p122
    %s125 = sadd.s32 %s124, 1
    %p128 = scmp.eq.s32.totalorder %s13, 3
    %p129 = scmp.ne.s32.totalorder %s124, %s126
    %p130 = scmp.eq.s32.totalorder %s13, 0
    %p131 = por %p129, %p130
    %p132 = scmp.ne.s32.totalorder %s124, %s126
    %p133 = scmp.eq.s32.totalorder %s18, 3
    %p134 = por %p132, %p133
    %p135 = scmp.ne.s32.totalorder %s126, %s127
    %p136 = scmp.eq.s32.totalorder %s18, 0
    %p137 = por %p135, %p136
    %p138 = scmp.ne.s32.totalorder %s126, %s127
    %p139 = scmp.eq.s32.totalorder %s19, 3
    %p140 = por %p138, %p139
    %p142 = scmp.ne.s32.totalorder %s127, %s141
    %p143 = scmp.eq.s32.totalorder %s19, 0
    %p144 = por %p142, %p143
    %s145 = ssub.s32 %s20, %s32
    %s146 = ssub.s32 %s21, %s28
    %s147 = sor.u32 %s145, %s146
    %p148 = scmp.eq.s32.totalorder %s147, 0
    %s150 = sadd.s32 %s149, 1
    %s151 = scalar_select %p148, %s149, %s150
    %p154 = pneg %p148
    %p155 = scmp.eq.s32.totalorder %s13, 3
    %p156 = por %p154, %p155
    %p157 = scmp.ne.s32.totalorder %s149, %s152
    %p158 = scmp.eq.s32.totalorder %s13, 0
    %p159 = por %p157, %p158
    %p160 = scmp.ne.s32.totalorder %s149, %s152
    %p161 = scmp.eq.s32.totalorder %s18, 3
    %p162 = por %p160, %p161
    %p163 = scmp.ne.s32.totalorder %s152, %s153
    %p164 = scmp.eq.s32.totalorder %s18, 0
    %p165 = por %p163, %p164
    %p166 = scmp.ne.s32.totalorder %s152, %s153
    %p167 = scmp.eq.s32.totalorder %s19, 3
    %p168 = por %p166, %p167
    %p170 = scmp.ne.s32.totalorder %s153, %s169
    %p171 = scmp.eq.s32.totalorder %s19, 0
    %p172 = por %p170, %p171
    %s173 = ssub.s32 %s20, %s32
    %s174 = ssub.s32 %s21, %s28
    %s175 = sor.u32 %s173, %s174
    %p176 = scmp.eq.s32.totalorder %s175, 0
    %s178 = sadd.s32 %s177, 1
    %s179 = scalar_select %p176, %s177, %s178
    %p182 = pneg %p176
    %p183 = scmp.eq.s32.totalorder %s13, 3
    %p184 = por %p182, %p183
    %p185 = scmp.ne.s32.totalorder %s177, %s180
    %p186 = scmp.eq.s32.totalorder %s13, 0
    %p187 = por %p185, %p186
    %p188 = scmp.ne.s32.totalorder %s177, %s180
    %p189 = scmp.eq.s32.totalorder %s18, 3
    %p190 = por %p188, %p189
    %p191 = scmp.ne.s32.totalorder %s180, %s181
    %p192 = scmp.eq.s32.totalorder %s18, 0
    %p193 = por %p191, %p192
    %p194 = scmp.ne.s32.totalorder %s180, %s181
    %p195 = scmp.eq.s32.totalorder %s19, 3
    %p196 = por %p194, %p195
    %p198 = scmp.ne.s32.totalorder %s181, %s197
    %p199 = scmp.eq.s32.totalorder %s19, 0
    %p200 = por %p198, %p199
    %p201 = scmp.le.s32.totalorder 1, %s13
    %p202 = scmp.lt.s32.totalorder %s13, 5
    %p203 = pnand %p201, %p202
    %p204 = pneg %p203
    // Predicated region
    $region9: #{mobilenet_block.4} parent=5 // pred_check
      _
    $region10: #{mobilenet_block.4} parent=5 // pred_check_branch
      %206 = sbr.rel (%p203) target = $region12
    $region11: #{mobilenet_block.4} parent=5 // pred_region
      %s207 = ssub.s32 %s13, 1
      // Predicated region
      $region13: #{mobilenet_block.4} parent=11 // pred_check
        %p208 = pneg %p74
      $region14: #{mobilenet_block.4} parent=11 // pred_check_branch
        %210 = sbr.rel (%p208) target = $region16
      $region15: #{mobilenet_block.4} parent=11 // pred_region
        _
      $region16: #{mobilenet_block.4} parent=11 // pred_fallthru
        _
      // Predicated region
      $region17: #{mobilenet_block.4} parent=11 // pred_check
        %p211 = pneg %p95
      $region18: #{mobilenet_block.4} parent=11 // pred_check_branch
        %213 = sbr.rel (%p211) target = $region20
      $region19: #{mobilenet_block.4} parent=11 // pred_region
        _
      $region20: #{mobilenet_block.4} parent=11 // pred_fallthru
        _
      // Predicated region
      $region21: #{mobilenet_block.4} parent=11 // pred_check
        %p214 = pneg %p116
      $region22: #{mobilenet_block.4} parent=11 // pred_check_branch
        %216 = sbr.rel (%p214) target = $region24
      $region23: #{mobilenet_block.4} parent=11 // pred_region
        _
      $region24: #{mobilenet_block.4} parent=11 // pred_fallthru
        _
      // Predicated region
      $region25: #{mobilenet_block.4} parent=11 // pred_check
        %p217 = pneg %p137
      $region26: #{mobilenet_block.4} parent=11 // pred_check_branch
        %219 = sbr.rel (%p217) target = $region28
      $region27: #{mobilenet_block.4} parent=11 // pred_region
        _
      $region28: #{mobilenet_block.4} parent=11 // pred_fallthru
        _
    $region12: #{mobilenet_block.4} parent=5 // pred_fallthru
      _
    %p220 = scmp.lt.s32.totalorder %s13, 4
    // Predicated region
    $region29: #{mobilenet_block.4} parent=5 // pred_check
      %p221 = pneg %p220
    $region30: #{mobilenet_block.4} parent=5 // pred_check_branch
      %223 = sbr.rel (%p221) target = $region32
    $region31: #{mobilenet_block.4} parent=5 // pred_region
      // Predicated region
      $region33: #{mobilenet_block.4} parent=31 // pred_check
        %p224 = pneg %p47
      $region34: #{mobilenet_block.4} parent=31 // pred_check_branch
        %226 = sbr.rel (%p224) target = $region36
      $region35: #{mobilenet_block.4} parent=31 // pred_region
        %p227 = scmp.lt.s32.totalorder %s20, 1
        %s228 = scalar_select %p227, %s20, 1
        %p229 = scmp.lt.s32.totalorder %s21, 1
        %s230 = scalar_select %p229, %s21, 1
        %s231 = smul.addr %s230, 30
        %s232 = smul.addr %s228, 60
        %s233 = sadd.s32 %s231, %s232
        %s234 = smul.addr %s233, 8
        %s235 = scalar_lea.vmem %s0, %s234
      $region36: #{mobilenet_block.4} parent=31 // pred_fallthru
        _
    $region32: #{mobilenet_block.4} parent=5 // pred_fallthru
      _
    %p236 = scmp.le.s32.totalorder 1, %s13
    %p237 = scmp.lt.s32.totalorder %s13, 5
    %p238 = pnand %p236, %p237
    %p239 = pneg %p238
    // Predicated region
    $region37: #{mobilenet_block.4} parent=5 // pred_check
      _
    $region38: #{mobilenet_block.4} parent=5 // pred_check_branch
      %241 = sbr.rel (%p238) target = $region40
    $region39: #{mobilenet_block.4} parent=5 // pred_region
      %s242 = ssub.s32 %s13, 1
      %p243 = scmp.lt.s32.totalorder %s22, 1
      %s244 = scalar_select %p243, %s22, 1
      %p245 = scmp.lt.s32.totalorder %s23, 1
      %s246 = scalar_select %p245, %s23, 1
      %s247 = smul.addr %s246, 30
      %s248 = smul.addr %s244, 60
      %s249 = sadd.s32 %s247, %s248
      %s250 = smul.addr %s249, 8
      %s251 = scalar_lea.vmem %s0, %s250
      %p252 = pneg %p53
      %p253 = pneg %p50
      %p254 = pneg %p74
      %p255 = pneg %p71
      %p256 = pneg %p95
      %p257 = pneg %p92
      %p258 = pneg %p116
      %p259 = pneg %p113
      %p260 = pneg %p137
      %p261 = pneg %p134
      %p262 = pneg %p165
      %p263 = pneg %p162
      %s264 = smul.u32 8, %s23
      %p265 = scmp.lt.s32.totalorder %s22, 1
      %s266 = scalar_select %p265, %s22, 1
      %p267 = scmp.lt.s32.totalorder %s264, 15
      %s268 = scalar_select %p267, %s264, 15
      %s269 = smul.addr %s268, 2
      %s270 = smul.addr %s266, 32
      %s271 = sadd.s32 %s269, %s270
      %s272 = smul.addr %s271, 4
      %s273 = scalar_lea.vmem %s5, %s272
      %p274 = pneg %p193
      %p275 = pneg %p190
      %p276 = scmp.lt.s32.totalorder %s22, 1
      %s277 = scalar_select %p276, %s22, 1
      %p278 = scmp.lt.s32.totalorder %s23, 1
      %s279 = scalar_select %p278, %s23, 1
      %s280 = smul.addr %s277, 2
      %s281 = sadd.s32 %s279, %s280
      %s282 = smul.addr %s281, 2
      %s283 = scalar_lea.vmem %s6, %s282
      %p284 = scmp.lt.s32.totalorder %s22, 1
      %s285 = scalar_select %p284, %s22, 1
      %p286 = scmp.lt.s32.totalorder %s23, 1
      %s287 = scalar_select %p286, %s23, 1
      %s288 = smul.addr %s287, 30
      %s289 = smul.addr %s285, 60
      %s290 = sadd.s32 %s288, %s289
      %s291 = smul.addr %s290, 8
      %s292 = scalar_lea.vmem %s0, %s291
      %s293 = smul.u32 8, %s23
      %p294 = scmp.lt.s32.totalorder %s22, 1
      %s295 = scalar_select %p294, %s22, 1
      %p296 = scmp.lt.s32.totalorder %s293, 15
      %s297 = scalar_select %p296, %s293, 15
      %s298 = smul.addr %s297, 2
      %s299 = smul.addr %s295, 32
      %s300 = sadd.s32 %s298, %s299
      %s301 = smul.addr %s300, 4
      %s302 = scalar_lea.vmem %s5, %s301
      %s303 = smul.u32 8, %s23
      %p304 = scmp.lt.s32.totalorder %s22, 1
      %s305 = scalar_select %p304, %s22, 1
      %p306 = scmp.lt.s32.totalorder %s23, 1
      %s307 = scalar_select %p306, %s23, 1
      %s308 = smul.addr %s305, 2
      %s309 = sadd.s32 %s307, %s308
      %s310 = smul.addr %s309, 2
      %s311 = scalar_lea.vmem %s6, %s310
      %v313 = vld [vmem:[%s1] sm:$0xff]
      %v314 = vld [vmem:[%s1 + $0x8] sm:$0x1]
      %v315 = vld [vmem:[%s292] sm:$0xff]
      %v316 = vld [vmem:[%s292 + $0x8] sm:$0xff]
      %v317 = vld [vmem:[%s292 + $0x18] sm:$0xff]
      %v318 = vld [vmem:[%s292 + $0x20] sm:$0xff]
      %v319 = vld [vmem:[%s292 + $0x30] sm:$0xff]
      %v320 = vld [vmem:[%s292 + $0x38] sm:$0xff]
      %v321 = vld [vmem:[%s292 + $0x48] sm:$0xff]
      %v322 = vld [vmem:[%s292 + $0x50] sm:$0xff]
      %v323 = vld [vmem:[%s292 + $0x60] sm:$0xff]
      %v324 = vld [vmem:[%s292 + $0x68] sm:$0xff]
      %v325 = vld [vmem:[%s292 + $0x78] sm:$0xff]
      %v326 = vld [vmem:[%s292 + $0x80] sm:$0xff]
      %v327 = vld [vmem:[%s292 + $0x90] sm:$0xff]
      %v328 = vld [vmem:[%s292 + $0x98] sm:$0xff]
      %v329 = vld [vmem:[%s292 + $0xa8] sm:$0xff]
      %v330 = vld [vmem:[%s292 + $0xb0] sm:$0xff]
      %v331 = vlaneseq
      %v332 = vshrl.u32 %v331, 7
      %v333 = vsub.s32 0, %v332
      %v334 = vrot.slane %v313, %v333
      %v335 = vmul.f32 %v315, %v334
      %v336 = vmul.f32 %v316, %v334
      %v337 = vmul.f32 %v317, %v334
      %v338 = vmul.f32 %v318, %v334
      %v339 = vmul.f32 %v319, %v334
      %v340 = vmul.f32 %v320, %v334
      %v341 = vmul.f32 %v321, %v334
      %v342 = vmul.f32 %v322, %v334
      %v343 = vmul.f32 %v323, %v334
      %v344 = vmul.f32 %v324, %v334
      %v345 = vmul.f32 %v325, %v334
      %v346 = vmul.f32 %v326, %v334
      %v347 = vmul.f32 %v327, %v334
      %v348 = vmul.f32 %v328, %v334
      %v349 = vmul.f32 %v329, %v334
      %v350 = vmul.f32 %v330, %v334
      %v351 = vadd.f32 %v335, 0.0
      %v352 = vadd.f32 %v336, 0.0
      %v353 = vadd.f32 %v337, 0.0
      %v354 = vadd.f32 %v338, 0.0
      %v355 = vadd.f32 %v339, 0.0
      %v356 = vadd.f32 %v340, 0.0
      %v357 = vadd.f32 %v341, 0.0
      %v358 = vadd.f32 %v342, 0.0
      %v359 = vadd.f32 %v343, 0.0
      %v360 = vadd.f32 %v344, 0.0
      %v361 = vadd.f32 %v345, 0.0
      %v362 = vadd.f32 %v346, 0.0
      %v363 = vadd.f32 %v347, 0.0
      %v364 = vadd.f32 %v348, 0.0
      %v365 = vadd.f32 %v349, 0.0
      %v366 = vadd.f32 %v350, 0.0
      %v367 = vld [vmem:[%s292 + $0x1] sm:$0xff]
      %v368 = vld [vmem:[%s292 + $0x9] sm:$0xff]
      %v369 = vld [vmem:[%s292 + $0x19] sm:$0xff]
      %v370 = vld [vmem:[%s292 + $0x21] sm:$0xff]
      %v371 = vld [vmem:[%s292 + $0x31] sm:$0xff]
      %v372 = vld [vmem:[%s292 + $0x39] sm:$0xff]
      %v373 = vld [vmem:[%s292 + $0x49] sm:$0xff]
      %v374 = vld [vmem:[%s292 + $0x51] sm:$0xff]
      %v375 = vld [vmem:[%s292 + $0x61] sm:$0xff]
      %v376 = vld [vmem:[%s292 + $0x69] sm:$0xff]
      %v377 = vld [vmem:[%s292 + $0x79] sm:$0xff]
      %v378 = vld [vmem:[%s292 + $0x81] sm:$0xff]
      %v379 = vld [vmem:[%s292 + $0x91] sm:$0xff]
      %v380 = vld [vmem:[%s292 + $0x99] sm:$0xff]
      %v381 = vld [vmem:[%s292 + $0xa9] sm:$0xff]
      %v382 = vld [vmem:[%s292 + $0xb1] sm:$0xff]
      %v383 = vlaneseq
      %v384 = vshrl.u32 %v383, 7
      %v385 = vsub.s32 1, %v384
      %v386 = vrot.slane %v313, %v385
      %v387 = vmul.f32 %v367, %v386
      %v388 = vmul.f32 %v368, %v386
      %v389 = vmul.f32 %v369, %v386
      %v390 = vmul.f32 %v370, %v386
      %v391 = vmul.f32 %v371, %v386
      %v392 = vmul.f32 %v372, %v386
      %v393 = vmul.f32 %v373, %v386
      %v394 = vmul.f32 %v374, %v386
      %v395 = vmul.f32 %v375, %v386
      %v396 = vmul.f32 %v376, %v386
      %v397 = vmul.f32 %v377, %v386
      %v398 = vmul.f32 %v378, %v386
      %v399 = vmul.f32 %v379, %v386
      %v400 = vmul.f32 %v380, %v386
      %v401 = vmul.f32 %v381, %v386
      %v402 = vmul.f32 %v382, %v386
      %v403 = vadd.f32 %v351, %v387
      %v404 = vadd.f32 %v352, %v388
      %v405 = vadd.f32 %v353, %v389
      %v406 = vadd.f32 %v354, %v390
      %v407 = vadd.f32 %v355, %v391
      %v408 = vadd.f32 %v356, %v392
      %v409 = vadd.f32 %v357, %v393
      %v410 = vadd.f32 %v358, %v394
      %v411 = vadd.f32 %v359, %v395
      %v412 = vadd.f32 %v360, %v396
      %v413 = vadd.f32 %v361, %v397
      %v414 = vadd.f32 %v362, %v398
      %v415 = vadd.f32 %v363, %v399
      %v416 = vadd.f32 %v364, %v400
      %v417 = vadd.f32 %v365, %v401
      %v418 = vadd.f32 %v366, %v402
      %v419 = vld [vmem:[%s292 + $0x2] sm:$0xff]
      %v420 = vld [vmem:[%s292 + $0xa] sm:$0xff]
      %v421 = vld [vmem:[%s292 + $0x1a] sm:$0xff]
      %v422 = vld [vmem:[%s292 + $0x22] sm:$0xff]
      %v423 = vld [vmem:[%s292 + $0x32] sm:$0xff]
      %v424 = vld [vmem:[%s292 + $0x3a] sm:$0xff]
      %v425 = vld [vmem:[%s292 + $0x4a] sm:$0xff]
      %v426 = vld [vmem:[%s292 + $0x52] sm:$0xff]
      %v427 = vld [vmem:[%s292 + $0x62] sm:$0xff]
      %v428 = vld [vmem:[%s292 + $0x6a] sm:$0xff]
      %v429 = vld [vmem:[%s292 + $0x7a] sm:$0xff]
      %v430 = vld [vmem:[%s292 + $0x82] sm:$0xff]
      %v431 = vld [vmem:[%s292 + $0x92] sm:$0xff]
      %v432 = vld [vmem:[%s292 + $0x9a] sm:$0xff]
      %v433 = vld [vmem:[%s292 + $0xaa] sm:$0xff]
      %v434 = vld [vmem:[%s292 + $0xb2] sm:$0xff]
      %v435 = vlaneseq
      %v436 = vshrl.u32 %v435, 7
      %v437 = vsub.s32 2, %v436
      %v438 = vrot.slane %v313, %v437
      %v439 = vmul.f32 %v419, %v438
      %v440 = vmul.f32 %v420, %v438
      %v441 = vmul.f32 %v421, %v438
      %v442 = vmul.f32 %v422, %v438
      %v443 = vmul.f32 %v423, %v438
      %v444 = vmul.f32 %v424, %v438
      %v445 = vmul.f32 %v425, %v438
      %v446 = vmul.f32 %v426, %v438
      %v447 = vmul.f32 %v427, %v438
      %v448 = vmul.f32 %v428, %v438
      %v449 = vmul.f32 %v429, %v438
      %v450 = vmul.f32 %v430, %v438
      %v451 = vmul.f32 %v431, %v438
      %v452 = vmul.f32 %v432, %v438
      %v453 = vmul.f32 %v433, %v438
      %v454 = vmul.f32 %v434, %v438
      %v455 = vadd.f32 %v403, %v439
      %v456 = vadd.f32 %v404, %v440
      %v457 = vadd.f32 %v405, %v441
      %v458 = vadd.f32 %v406, %v442
      %v459 = vadd.f32 %v407, %v443
      %v460 = vadd.f32 %v408, %v444
      %v461 = vadd.f32 %v409, %v445
      %v462 = vadd.f32 %v410, %v446
      %v463 = vadd.f32 %v411, %v447
      %v464 = vadd.f32 %v412, %v448
      %v465 = vadd.f32 %v413, %v449
      %v466 = vadd.f32 %v414, %v450
      %v467 = vadd.f32 %v415, %v451
      %v468 = vadd.f32 %v416, %v452
      %v469 = vadd.f32 %v417, %v453
      %v470 = vadd.f32 %v418, %v454
      %s471 = scalar_lea.vmem %s292, 24
      %v472 = vld [vmem:[%s471] sm:$0xff]
      %v473 = vld [vmem:[%s471 + $0x8] sm:$0xff]
      %v474 = vld [vmem:[%s471 + $0x18] sm:$0xff]
      %v475 = vld [vmem:[%s471 + $0x20] sm:$0xff]
      %v476 = vld [vmem:[%s471 + $0x30] sm:$0xff]
      %v477 = vld [vmem:[%s471 + $0x38] sm:$0xff]
      %v478 = vld [vmem:[%s471 + $0x48] sm:$0xff]
      %v479 = vld [vmem:[%s471 + $0x50] sm:$0xff]
      %v480 = vld [vmem:[%s471 + $0x60] sm:$0xff]
      %v481 = vld [vmem:[%s471 + $0x68] sm:$0xff]
      %v482 = vld [vmem:[%s471 + $0x78] sm:$0xff]
      %v483 = vld [vmem:[%s471 + $0x80] sm:$0xff]
      %v484 = vld [vmem:[%s471 + $0x90] sm:$0xff]
      %v485 = vld [vmem:[%s471 + $0x98] sm:$0xff]
      %v486 = vld [vmem:[%s471 + $0xa8] sm:$0xff]
      %v487 = vld [vmem:[%s471 + $0xb0] sm:$0xff]
      %v488 = vlaneseq
      %v489 = vshrl.u32 %v488, 7
      %v490 = vsub.s32 3, %v489
      %v491 = vrot.slane %v313, %v490
      %v492 = vmul.f32 %v472, %v491
      %v493 = vmul.f32 %v473, %v491
      %v494 = vmul.f32 %v474, %v491
      %v495 = vmul.f32 %v475, %v491
      %v496 = vmul.f32 %v476, %v491
      %v497 = vmul.f32 %v477, %v491
      %v498 = vmul.f32 %v478, %v491
      %v499 = vmul.f32 %v479, %v491
      %v500 = vmul.f32 %v480, %v491
      %v501 = vmul.f32 %v481, %v491
      %v502 = vmul.f32 %v482, %v491
      %v503 = vmul.f32 %v483, %v491
      %v504 = vmul.f32 %v484, %v491
      %v505 = vmul.f32 %v485, %v491
      %v506 = vmul.f32 %v486, %v491
      %v507 = vmul.f32 %v487, %v491
      %v508 = vadd.f32 %v455, %v492
      %v509 = vadd.f32 %v456, %v493
      %v510 = vadd.f32 %v457, %v494
      %v511 = vadd.f32 %v458, %v495
      %v512 = vadd.f32 %v459, %v496
      %v513 = vadd.f32 %v460, %v497
      %v514 = vadd.f32 %v461, %v498
      %v515 = vadd.f32 %v462, %v499
      %v516 = vadd.f32 %v463, %v500
      %v517 = vadd.f32 %v464, %v501
      %v518 = vadd.f32 %v465, %v502
      %v519 = vadd.f32 %v466, %v503
      %v520 = vadd.f32 %v467, %v504
      %v521 = vadd.f32 %v468, %v505
      %v522 = vadd.f32 %v469, %v506
      %v523 = vadd.f32 %v470, %v507
      %v524 = vld [vmem:[%s471 + $0x1] sm:$0xff]
      %v525 = vld [vmem:[%s471 + $0x9] sm:$0xff]
      %v526 = vld [vmem:[%s471 + $0x19] sm:$0xff]
      %v527 = vld [vmem:[%s471 + $0x21] sm:$0xff]
      %v528 = vld [vmem:[%s471 + $0x31] sm:$0xff]
      %v529 = vld [vmem:[%s471 + $0x39] sm:$0xff]
      %v530 = vld [vmem:[%s471 + $0x49] sm:$0xff]
      %v531 = vld [vmem:[%s471 + $0x51] sm:$0xff]
      %v532 = vld [vmem:[%s471 + $0x61] sm:$0xff]
      %v533 = vld [vmem:[%s471 + $0x69] sm:$0xff]
      %v534 = vld [vmem:[%s471 + $0x79] sm:$0xff]
      %v535 = vld [vmem:[%s471 + $0x81] sm:$0xff]
      %v536 = vld [vmem:[%s471 + $0x91] sm:$0xff]
      %v537 = vld [vmem:[%s471 + $0x99] sm:$0xff]
      %v538 = vld [vmem:[%s471 + $0xa9] sm:$0xff]
      %v539 = vld [vmem:[%s471 + $0xb1] sm:$0xff]
      %v540 = vlaneseq
      %v541 = vshrl.u32 %v540, 7
      %v542 = vsub.s32 4, %v541
      %v543 = vrot.slane %v313, %v542
      %v544 = vmul.f32 %v524, %v543
      %v545 = vmul.f32 %v525, %v543
      %v546 = vmul.f32 %v526, %v543
      %v547 = vmul.f32 %v527, %v543
      %v548 = vmul.f32 %v528, %v543
      %v549 = vmul.f32 %v529, %v543
      %v550 = vmul.f32 %v530, %v543
      %v551 = vmul.f32 %v531, %v543
      %v552 = vmul.f32 %v532, %v543
      %v553 = vmul.f32 %v533, %v543
      %v554 = vmul.f32 %v534, %v543
      %v555 = vmul.f32 %v535, %v543
      %v556 = vmul.f32 %v536, %v543
      %v557 = vmul.f32 %v537, %v543
      %v558 = vmul.f32 %v538, %v543
      %v559 = vmul.f32 %v539, %v543
      %v560 = vadd.f32 %v508, %v544
      %v561 = vadd.f32 %v509, %v545
      %v562 = vadd.f32 %v510, %v546
      %v563 = vadd.f32 %v511, %v547
      %v564 = vadd.f32 %v512, %v548
      %v565 = vadd.f32 %v513, %v549
      %v566 = vadd.f32 %v514, %v550
      %v567 = vadd.f32 %v515, %v551
      %v568 = vadd.f32 %v516, %v552
      %v569 = vadd.f32 %v517, %v553
      %v570 = vadd.f32 %v518, %v554
      %v571 = vadd.f32 %v519, %v555
      %v572 = vadd.f32 %v520, %v556
      %v573 = vadd.f32 %v521, %v557
      %v574 = vadd.f32 %v522, %v558
      %v575 = vadd.f32 %v523, %v559
      %v576 = vld [vmem:[%s471 + $0x2] sm:$0xff]
      %v577 = vld [vmem:[%s471 + $0xa] sm:$0xff]
      %v578 = vld [vmem:[%s471 + $0x1a] sm:$0xff]
      %v579 = vld [vmem:[%s471 + $0x22] sm:$0xff]
      %v580 = vld [vmem:[%s471 + $0x32] sm:$0xff]
      %v581 = vld [vmem:[%s471 + $0x3a] sm:$0xff]
      %v582 = vld [vmem:[%s471 + $0x4a] sm:$0xff]
      %v583 = vld [vmem:[%s471 + $0x52] sm:$0xff]
      %v584 = vld [vmem:[%s471 + $0x62] sm:$0xff]
      %v585 = vld [vmem:[%s471 + $0x6a] sm:$0xff]
      %v586 = vld [vmem:[%s471 + $0x7a] sm:$0xff]
      %v587 = vld [vmem:[%s471 + $0x82] sm:$0xff]
      %v588 = vld [vmem:[%s471 + $0x92] sm:$0xff]
      %v589 = vld [vmem:[%s471 + $0x9a] sm:$0xff]
      %v590 = vld [vmem:[%s471 + $0xaa] sm:$0xff]
      %v591 = vld [vmem:[%s471 + $0xb2] sm:$0xff]
      %v592 = vlaneseq
      %v593 = vshrl.u32 %v592, 7
      %v594 = vsub.s32 5, %v593
      %v595 = vrot.slane %v313, %v594
      %v596 = vmul.f32 %v576, %v595
      %v597 = vmul.f32 %v577, %v595
      %v598 = vmul.f32 %v578, %v595
      %v599 = vmul.f32 %v579, %v595
      %v600 = vmul.f32 %v580, %v595
      %v601 = vmul.f32 %v581, %v595
      %v602 = vmul.f32 %v582, %v595
      %v603 = vmul.f32 %v583, %v595
      %v604 = vmul.f32 %v584, %v595
      %v605 = vmul.f32 %v585, %v595
      %v606 = vmul.f32 %v586, %v595
      %v607 = vmul.f32 %v587, %v595
      %v608 = vmul.f32 %v588, %v595
      %v609 = vmul.f32 %v589, %v595
      %v610 = vmul.f32 %v590, %v595
      %v611 = vmul.f32 %v591, %v595
      %v612 = vadd.f32 %v560, %v596
      %v613 = vadd.f32 %v561, %v597
      %v614 = vadd.f32 %v562, %v598
      %v615 = vadd.f32 %v563, %v599
      %v616 = vadd.f32 %v564, %v600
      %v617 = vadd.f32 %v565, %v601
      %v618 = vadd.f32 %v566, %v602
      %v619 = vadd.f32 %v567, %v603
      %v620 = vadd.f32 %v568, %v604
      %v621 = vadd.f32 %v569, %v605
      %v622 = vadd.f32 %v570, %v606
      %v623 = vadd.f32 %v571, %v607
      %v624 = vadd.f32 %v572, %v608
      %v625 = vadd.f32 %v573, %v609
      %v626 = vadd.f32 %v574, %v610
      %v627 = vadd.f32 %v575, %v611
      %s628 = scalar_lea.vmem %s292, 48
      %v629 = vld [vmem:[%s628] sm:$0xff]
      %v630 = vld [vmem:[%s628 + $0x8] sm:$0xff]
      %v631 = vld [vmem:[%s628 + $0x18] sm:$0xff]
      %v632 = vld [vmem:[%s628 + $0x20] sm:$0xff]
      %v633 = vld [vmem:[%s628 + $0x30] sm:$0xff]
      %v634 = vld [vmem:[%s628 + $0x38] sm:$0xff]
      %v635 = vld [vmem:[%s628 + $0x48] sm:$0xff]
      %v636 = vld [vmem:[%s628 + $0x50] sm:$0xff]
      %v637 = vld [vmem:[%s628 + $0x60] sm:$0xff]
      %v638 = vld [vmem:[%s628 + $0x68] sm:$0xff]
      %v639 = vld [vmem:[%s628 + $0x78] sm:$0xff]
      %v640 = vld [vmem:[%s628 + $0x80] sm:$0xff]
      %v641 = vld [vmem:[%s628 + $0x90] sm:$0xff]
      %v642 = vld [vmem:[%s628 + $0x98] sm:$0xff]
      %v643 = vld [vmem:[%s628 + $0xa8] sm:$0xff]
      %v644 = vld [vmem:[%s628 + $0xb0] sm:$0xff]
      %v645 = vlaneseq
      %v646 = vshrl.u32 %v645, 7
      %v647 = vsub.s32 6, %v646
      %v648 = vrot.slane %v313, %v647
      %v649 = vmul.f32 %v629, %v648
      %v650 = vmul.f32 %v630, %v648
      %v651 = vmul.f32 %v631, %v648
      %v652 = vmul.f32 %v632, %v648
      %v653 = vmul.f32 %v633, %v648
      %v654 = vmul.f32 %v634, %v648
      %v655 = vmul.f32 %v635, %v648
      %v656 = vmul.f32 %v636, %v648
      %v657 = vmul.f32 %v637, %v648
      %v658 = vmul.f32 %v638, %v648
      %v659 = vmul.f32 %v639, %v648
      %v660 = vmul.f32 %v640, %v648
      %v661 = vmul.f32 %v641, %v648
      %v662 = vmul.f32 %v642, %v648
      %v663 = vmul.f32 %v643, %v648
      %v664 = vmul.f32 %v644, %v648
      %v665 = vadd.f32 %v612, %v649
      %v666 = vadd.f32 %v613, %v650
      %v667 = vadd.f32 %v614, %v651
      %v668 = vadd.f32 %v615, %v652
      %v669 = vadd.f32 %v616, %v653
      %v670 = vadd.f32 %v617, %v654
      %v671 = vadd.f32 %v618, %v655
      %v672 = vadd.f32 %v619, %v656
      %v673 = vadd.f32 %v620, %v657
      %v674 = vadd.f32 %v621, %v658
      %v675 = vadd.f32 %v622, %v659
      %v676 = vadd.f32 %v623, %v660
      %v677 = vadd.f32 %v624, %v661
      %v678 = vadd.f32 %v625, %v662
      %v679 = vadd.f32 %v626, %v663
      %v680 = vadd.f32 %v627, %v664
      %v681 = vld [vmem:[%s628 + $0x1] sm:$0xff]
      %v682 = vld [vmem:[%s628 + $0x9] sm:$0xff]
      %v683 = vld [vmem:[%s628 + $0x19] sm:$0xff]
      %v684 = vld [vmem:[%s628 + $0x21] sm:$0xff]
      %v685 = vld [vmem:[%s628 + $0x31] sm:$0xff]
      %v686 = vld [vmem:[%s628 + $0x39] sm:$0xff]
      %v687 = vld [vmem:[%s628 + $0x49] sm:$0xff]
      %v688 = vld [vmem:[%s628 + $0x51] sm:$0xff]
      %v689 = vld [vmem:[%s628 + $0x61] sm:$0xff]
      %v690 = vld [vmem:[%s628 + $0x69] sm:$0xff]
      %v691 = vld [vmem:[%s628 + $0x79] sm:$0xff]
      %v692 = vld [vmem:[%s628 + $0x81] sm:$0xff]
      %v693 = vld [vmem:[%s628 + $0x91] sm:$0xff]
      %v694 = vld [vmem:[%s628 + $0x99] sm:$0xff]
      %v695 = vld [vmem:[%s628 + $0xa9] sm:$0xff]
      %v696 = vld [vmem:[%s628 + $0xb1] sm:$0xff]
      %v697 = vlaneseq
      %v698 = vshrl.u32 %v697, 7
      %v699 = vsub.s32 7, %v698
      %v700 = vrot.slane %v313, %v699
      %v701 = vmul.f32 %v681, %v700
      %v702 = vmul.f32 %v682, %v700
      %v703 = vmul.f32 %v683, %v700
      %v704 = vmul.f32 %v684, %v700
      %v705 = vmul.f32 %v685, %v700
      %v706 = vmul.f32 %v686, %v700
      %v707 = vmul.f32 %v687, %v700
      %v708 = vmul.f32 %v688, %v700
      %v709 = vmul.f32 %v689, %v700
      %v710 = vmul.f32 %v690, %v700
      %v711 = vmul.f32 %v691, %v700
      %v712 = vmul.f32 %v692, %v700
      %v713 = vmul.f32 %v693, %v700
      %v714 = vmul.f32 %v694, %v700
      %v715 = vmul.f32 %v695, %v700
      %v716 = vmul.f32 %v696, %v700
      %v717 = vadd.f32 %v665, %v701
      %v718 = vadd.f32 %v666, %v702
      %v719 = vadd.f32 %v667, %v703
      %v720 = vadd.f32 %v668, %v704
      %v721 = vadd.f32 %v669, %v705
      %v722 = vadd.f32 %v670, %v706
      %v723 = vadd.f32 %v671, %v707
      %v724 = vadd.f32 %v672, %v708
      %v725 = vadd.f32 %v673, %v709
      %v726 = vadd.f32 %v674, %v710
      %v727 = vadd.f32 %v675, %v711
      %v728 = vadd.f32 %v676, %v712
      %v729 = vadd.f32 %v677, %v713
      %v730 = vadd.f32 %v678, %v714
      %v731 = vadd.f32 %v679, %v715
      %v732 = vadd.f32 %v680, %v716
      %v733 = vld [vmem:[%s628 + $0x2] sm:$0xff]
      %v734 = vld [vmem:[%s628 + $0xa] sm:$0xff]
      %v735 = vld [vmem:[%s628 + $0x1a] sm:$0xff]
      %v736 = vld [vmem:[%s628 + $0x22] sm:$0xff]
      %v737 = vld [vmem:[%s628 + $0x32] sm:$0xff]
      %v738 = vld [vmem:[%s628 + $0x3a] sm:$0xff]
      %v739 = vld [vmem:[%s628 + $0x4a] sm:$0xff]
      %v740 = vld [vmem:[%s628 + $0x52] sm:$0xff]
      %v741 = vld [vmem:[%s628 + $0x62] sm:$0xff]
      %v742 = vld [vmem:[%s628 + $0x6a] sm:$0xff]
      %v743 = vld [vmem:[%s628 + $0x7a] sm:$0xff]
      %v744 = vld [vmem:[%s628 + $0x82] sm:$0xff]
      %v745 = vld [vmem:[%s628 + $0x92] sm:$0xff]
      %v746 = vld [vmem:[%s628 + $0x9a] sm:$0xff]
      %v747 = vld [vmem:[%s628 + $0xaa] sm:$0xff]
      %v748 = vld [vmem:[%s628 + $0xb2] sm:$0xff]
      %v749 = vlaneseq
      %v750 = vshrl.u32 %v749, 7
      %v751 = vsub.s32 0, %v750
      %v752 = vrot.slane %v314, %v751
      %v753 = vmul.f32 %v733, %v752
      %v754 = vmul.f32 %v734, %v752
      %v755 = vmul.f32 %v735, %v752
      %v756 = vmul.f32 %v736, %v752
      %v757 = vmul.f32 %v737, %v752
      %v758 = vmul.f32 %v738, %v752
      %v759 = vmul.f32 %v739, %v752
      %v760 = vmul.f32 %v740, %v752
      %v761 = vmul.f32 %v741, %v752
      %v762 = vmul.f32 %v742, %v752
      %v763 = vmul.f32 %v743, %v752
      %v764 = vmul.f32 %v744, %v752
      %v765 = vmul.f32 %v745, %v752
      %v766 = vmul.f32 %v746, %v752
      %v767 = vmul.f32 %v747, %v752
      %v768 = vmul.f32 %v748, %v752
      %v769 = vadd.f32 %v717, %v753
      %v770 = vadd.f32 %v718, %v754
      %v771 = vadd.f32 %v719, %v755
      %v772 = vadd.f32 %v720, %v756
      %v773 = vadd.f32 %v721, %v757
      %v774 = vadd.f32 %v722, %v758
      %v775 = vadd.f32 %v723, %v759
      %v776 = vadd.f32 %v724, %v760
      %v777 = vadd.f32 %v725, %v761
      %v778 = vadd.f32 %v726, %v762
      %v779 = vadd.f32 %v727, %v763
      %v780 = vadd.f32 %v728, %v764
      %v781 = vadd.f32 %v729, %v765
      %v782 = vadd.f32 %v730, %v766
      %v783 = vadd.f32 %v731, %v767
      %v784 = vadd.f32 %v732, %v768
      %v785 = vld [vmem:[%s2] sm:$0x1]
      %v786 = vld [vmem:[%s3] sm:$0x1]
      %v788 = vlaneseq
      %v789 = vshrl.u32 %v788, 7
      %v790 = vsub.s32 0, %v789
      %v791 = vrot.slane %v785, %v790
      %v793 = vmul.f32 %v769, %v791
      %v794 = vmul.f32 %v770, %v791
      %v795 = vmul.f32 %v771, %v791
      %v796 = vmul.f32 %v772, %v791
      %v797 = vmul.f32 %v773, %v791
      %v798 = vmul.f32 %v774, %v791
      %v799 = vmul.f32 %v775, %v791
      %v800 = vmul.f32 %v776, %v791
      %v801 = vmul.f32 %v777, %v791
      %v802 = vmul.f32 %v778, %v791
      %v803 = vmul.f32 %v779, %v791
      %v804 = vmul.f32 %v780, %v791
      %v805 = vmul.f32 %v781, %v791
      %v806 = vmul.f32 %v782, %v791
      %v807 = vmul.f32 %v783, %v791
      %v808 = vmul.f32 %v784, %v791
      %v810 = vlaneseq
      %v811 = vshrl.u32 %v810, 7
      %v812 = vsub.s32 0, %v811
      %v813 = vrot.slane %v786, %v812
      %v815 = vadd.f32 %v793, %v813
      %v816 = vadd.f32 %v794, %v813
      %v817 = vadd.f32 %v795, %v813
      %v818 = vadd.f32 %v796, %v813
      %v819 = vadd.f32 %v797, %v813
      %v820 = vadd.f32 %v798, %v813
      %v821 = vadd.f32 %v799, %v813
      %v822 = vadd.f32 %v800, %v813
      %v823 = vadd.f32 %v801, %v813
      %v824 = vadd.f32 %v802, %v813
      %v825 = vadd.f32 %v803, %v813
      %v826 = vadd.f32 %v804, %v813
      %v827 = vadd.f32 %v805, %v813
      %v828 = vadd.f32 %v806, %v813
      %v829 = vadd.f32 %v807, %v813
      %v830 = vadd.f32 %v808, %v813
      %v831 = vmax.f32 %v815, 0.0
      %v832 = vmax.f32 %v816, 0.0
      %v833 = vmax.f32 %v817, 0.0
      %v834 = vmax.f32 %v818, 0.0
      %v835 = vmax.f32 %v819, 0.0
      %v836 = vmax.f32 %v820, 0.0
      %v837 = vmax.f32 %v821, 0.0
      %v838 = vmax.f32 %v822, 0.0
      %v839 = vmax.f32 %v823, 0.0
      %v840 = vmax.f32 %v824, 0.0
      %v841 = vmax.f32 %v825, 0.0
      %v842 = vmax.f32 %v826, 0.0
      %v843 = vmax.f32 %v827, 0.0
      %v844 = vmax.f32 %v828, 0.0
      %v845 = vmax.f32 %v829, 0.0
      %v846 = vmax.f32 %v830, 0.0
      %v847 = vpack.c.bf16 %v832, %v831
      %v848 = vpack.c.bf16 %v834, %v833
      %v849 = vpack.c.bf16 %v836, %v835
      %v850 = vpack.c.bf16 %v838, %v837
      %v851 = vpack.c.bf16 %v840, %v839
      %v852 = vpack.c.bf16 %v842, %v841
      %v853 = vpack.c.bf16 %v844, %v843
      %v854 = vpack.c.bf16 %v846, %v845
      %v855 = vld [vmem:[%s4] sm:$0xf]
      %v856 = vld [vmem:[%s4 + $0x4] sm:$0xf]
      %v857 = vld [vmem:[%s4 + $0x8] sm:$0xf]
      %v858 = vld [vmem:[%s4 + $0xc] sm:$0xf]
      %v859 = vld [vmem:[%s4 + $0x10] sm:$0xf]
      %v860 = vld [vmem:[%s4 + $0x14] sm:$0xf]
      %v861 = vld [vmem:[%s4 + $0x18] sm:$0xf]
      %v862 = vld [vmem:[%s4 + $0x1c] sm:$0xf]
      %v863 = vld [vmem:[%s4 + $0x20] sm:$0xf]
      %v864 = vld [vmem:[%s4 + $0x24] sm:$0xf]
      %v865 = vld [vmem:[%s4 + $0x28] sm:$0xf]
      %v866 = vld [vmem:[%s4 + $0x2c] sm:$0xf]
      %v867 = vld [vmem:[%s4 + $0x30] sm:$0xf]
      %v868 = vld [vmem:[%s4 + $0x34] sm:$0xf]
      %v869 = vld [vmem:[%s4 + $0x38] sm:$0xf]
      %v870 = vld [vmem:[%s4 + $0x3c] sm:$0xf]
      %v887 = vunpack.c.l.b16 %v855
      %v888 = vunpack.c.l.b16 %v856
      %v889 = vunpack.c.l.b16 %v857
      %v890 = vunpack.c.l.b16 %v858
      %v891 = vunpack.c.l.b16 %v859
      %v892 = vunpack.c.l.b16 %v860
      %v893 = vunpack.c.l.b16 %v861
      %v894 = vunpack.c.l.b16 %v862
      %v895 = vunpack.c.l.b16 %v863
      %v896 = vunpack.c.l.b16 %v864
      %v897 = vunpack.c.l.b16 %v865
      %v898 = vunpack.c.l.b16 %v866
      %v899 = vunpack.c.l.b16 %v867
      %v900 = vunpack.c.l.b16 %v868
      %v901 = vunpack.c.l.b16 %v869
      %v902 = vunpack.c.l.b16 %v870
      %v903 = vpack.c.b16 %v888, %v887
      %v904 = vpack.c.b16 %v890, %v889
      %v905 = vpack.c.b16 %v892, %v891
      %v906 = vpack.c.b16 %v894, %v893
      %v907 = vpack.c.b16 %v896, %v895
      %v908 = vpack.c.b16 %v898, %v897
      %v909 = vpack.c.b16 %v900, %v899
      %v910 = vpack.c.b16 %v902, %v901
      %919 = vmatprep.subr.bf16.mxu0 0
      %920 = vmatpush1.bf16.msra.mxu0 %v910
      %921 = vmatprep.subr.bf16.mxu0 0
      %922 = vmatpush1.bf16.msra.mxu0 %v909
      %923 = vmatprep.subr.bf16.mxu0 0
      %924 = vmatpush1.bf16.msra.mxu0 %v908
      %925 = vmatprep.subr.bf16.mxu0 0
      %926 = vmatpush1.bf16.msra.mxu0 %v907
      %927 = vmatprep.subr.bf16.mxu0 0
      %928 = vmatpush1.bf16.msra.mxu0 %v906
      %929 = vmatprep.subr.bf16.mxu0 0
      %930 = vmatpush1.bf16.msra.mxu0 %v905
      %931 = vmatprep.subr.bf16.mxu0 0
      %932 = vmatpush1.bf16.msra.mxu0 %v904
      %933 = vmatprep.subr.bf16.mxu0 0
      %934 = vmatpush1.bf16.msra.mxu0 %v903
      %935 = vmatprep.subr.bf16.mxu0 0
      %936 = vmatpush2.bf16.msra.mxu0 0
      %937 = vmatprep.subr.bf16.mxu0 0
      %938 = vmatpush2.bf16.msra.mxu0 0
      %939 = vmatprep.subr.bf16.mxu0 0
      %940 = vmatpush2.bf16.msra.mxu0 0
      %941 = vmatprep.subr.bf16.mxu0 0
      %942 = vmatpush2.bf16.msra.mxu0 0
      %943 = vmatprep.subr.bf16.mxu0 0
      %944 = vmatpush2.bf16.msra.mxu0 0
      %945 = vmatprep.subr.bf16.mxu0 0
      %946 = vmatpush2.bf16.msra.mxu0 0
      %947 = vmatprep.subr.bf16.mxu0 0
      %948 = vmatpush2.bf16.msra.mxu0 0
      %949 = vmatprep.subr.bf16.mxu0 0
      %950 = vmatpush2.bf16.msra.mxu0 0
      %951 = vmatprep.mubr.bf16.mxu0 0
      %952 = vmatmul.mubr.bf16.gmra.mxu0 %v847
      %v953 = vpop.f32.mrf.mxu0
      %v954 = vadd.f32 0.0, %v953
      %v955 = vpop.f32.mrf.mxu0
      %v956 = vpop.f32.mrf.mxu0
      %v957 = vadd.f32 0.0, %v956
      %v958 = vpop.f32.mrf.mxu0
      %959 = vmatprep.mubr.bf16.mxu0 0
      %960 = vmatmul.mubr.bf16.gmra.mxu0 %v848
      %v961 = vpop.f32.mrf.mxu0
      %v962 = vadd.f32 0.0, %v961
      %v963 = vpop.f32.mrf.mxu0
      %v964 = vpop.f32.mrf.mxu0
      %v965 = vadd.f32 0.0, %v964
      %v966 = vpop.f32.mrf.mxu0
      %967 = vmatprep.mubr.bf16.mxu0 0
      %968 = vmatmul.mubr.bf16.gmra.mxu0 %v849
      %v969 = vpop.f32.mrf.mxu0
      %v970 = vadd.f32 0.0, %v969
      %v971 = vpop.f32.mrf.mxu0
      %v972 = vpop.f32.mrf.mxu0
      %v973 = vadd.f32 0.0, %v972
      %v974 = vpop.f32.mrf.mxu0
      %975 = vmatprep.mubr.bf16.mxu0 0
      %976 = vmatmul.mubr.bf16.gmra.mxu0 %v850
      %v977 = vpop.f32.mrf.mxu0
      %v978 = vadd.f32 0.0, %v977
      %v979 = vpop.f32.mrf.mxu0
      %v980 = vpop.f32.mrf.mxu0
      %v981 = vadd.f32 0.0, %v980
      %v982 = vpop.f32.mrf.mxu0
      %983 = vmatprep.mubr.bf16.mxu0 0
      %984 = vmatmul.mubr.bf16.gmra.mxu0 %v851
      %v985 = vpop.f32.mrf.mxu0
      %v986 = vadd.f32 0.0, %v985
      %v987 = vpop.f32.mrf.mxu0
      %v988 = vpop.f32.mrf.mxu0
      %v989 = vadd.f32 0.0, %v988
      %v990 = vpop.f32.mrf.mxu0
      %991 = vmatprep.mubr.bf16.mxu0 0
      %992 = vmatmul.mubr.bf16.gmra.mxu0 %v852
      %v993 = vpop.f32.mrf.mxu0
      %v994 = vadd.f32 0.0, %v993
      %v995 = vpop.f32.mrf.mxu0
      %v996 = vpop.f32.mrf.mxu0
      %v997 = vadd.f32 0.0, %v996
      %v998 = vpop.f32.mrf.mxu0
      %999 = vmatprep.mubr.bf16.mxu0 0
      %1000 = vmatmul.mubr.bf16.gmra.mxu0 %v853
      %v1001 = vpop.f32.mrf.mxu0
      %v1002 = vadd.f32 0.0, %v1001
      %v1003 = vpop.f32.mrf.mxu0
      %v1004 = vpop.f32.mrf.mxu0
      %v1005 = vadd.f32 0.0, %v1004
      %v1006 = vpop.f32.mrf.mxu0
      %1007 = vmatprep.mubr.bf16.mxu0 0
      %1008 = vmatmul.mubr.bf16.gmra.mxu0 %v854
      %v1009 = vpop.f32.mrf.mxu0
      %v1010 = vadd.f32 0.0, %v1009
      %v1011 = vpop.f32.mrf.mxu0
      %v1012 = vpop.f32.mrf.mxu0
      %v1013 = vadd.f32 0.0, %v1012
      %v1014 = vpop.f32.mrf.mxu0
      %1015 = vdwg.mxu0
      %v1016 = vadd.f32 %v954, %v957
      %v1017 = vadd.f32 %v1016, %v962
      %v1018 = vadd.f32 %v1017, %v965
      %v1019 = vadd.f32 %v1018, %v970
      %v1020 = vadd.f32 %v1019, %v973
      %v1021 = vadd.f32 %v1020, %v978
      %v1022 = vadd.f32 %v1021, %v981
      %v1023 = vadd.f32 %v1022, %v986
      %v1024 = vadd.f32 %v1023, %v989
      %v1025 = vadd.f32 %v1024, %v994
      %v1026 = vadd.f32 %v1025, %v997
      %v1027 = vadd.f32 %v1026, %v1002
      %v1028 = vadd.f32 %v1027, %v1005
      %v1029 = vadd.f32 %v1028, %v1010
      %v1030 = vadd.f32 %v1029, %v1013
      %v1031 = vrot.slane %v1030, 4
      %v1032 = vadd.f32 %v1030, %v1031
      %v1033 = vrot.slane %v1032, 2
      %v1034 = vadd.f32 %v1032, %v1033
      %v1035 = vrot.slane %v1034, 1
      %v1036 = vadd.f32 %v1034, %v1035
      %v1037 = vmul.f32 %v954, %v954
      %v1038 = vmul.f32 %v957, %v957
      %v1039 = vmul.f32 %v962, %v962
      %v1040 = vmul.f32 %v965, %v965
      %v1041 = vmul.f32 %v970, %v970
      %v1042 = vmul.f32 %v973, %v973
      %v1043 = vmul.f32 %v978, %v978
      %v1044 = vmul.f32 %v981, %v981
      %v1045 = vmul.f32 %v986, %v986
      %v1046 = vmul.f32 %v989, %v989
      %v1047 = vmul.f32 %v994, %v994
      %v1048 = vmul.f32 %v997, %v997
      %v1049 = vmul.f32 %v1002, %v1002
      %v1050 = vmul.f32 %v1005, %v1005
      %v1051 = vmul.f32 %v1010, %v1010
      %v1052 = vmul.f32 %v1013, %v1013
      %v1053 = vadd.f32 %v1037, %v1038
      %v1054 = vadd.f32 %v1053, %v1039
      %v1055 = vadd.f32 %v1054, %v1040
      %v1056 = vadd.f32 %v1055, %v1041
      %v1057 = vadd.f32 %v1056, %v1042
      %v1058 = vadd.f32 %v1057, %v1043
      %v1059 = vadd.f32 %v1058, %v1044
      %v1060 = vadd.f32 %v1059, %v1045
      %v1061 = vadd.f32 %v1060, %v1046
      %v1062 = vadd.f32 %v1061, %v1047
      %v1063 = vadd.f32 %v1062, %v1048
      %v1064 = vadd.f32 %v1063, %v1049
      %v1065 = vadd.f32 %v1064, %v1050
      %v1066 = vadd.f32 %v1065, %v1051
      %v1067 = vadd.f32 %v1066, %v1052
      %v1068 = vrot.slane %v1067, 4
      %v1069 = vadd.f32 %v1067, %v1068
      %v1070 = vrot.slane %v1069, 2
      %v1071 = vadd.f32 %v1069, %v1070
      %v1072 = vrot.slane %v1071, 1
      %v1073 = vadd.f32 %v1071, %v1072
      %vm1074 = vcmask 1040384
      %v1075 = vsel %vm1074, %v1036, %v1073
      %1076 = vst [vmem:[%s311] sm:$0x3] %v1075
      %v1077 = vpack.c.bf16 %v957, %v954
      %v1078 = vpack.c.bf16 %v965, %v962
      %v1079 = vpack.c.bf16 %v973, %v970
      %v1080 = vpack.c.bf16 %v981, %v978
      %v1081 = vpack.c.bf16 %v989, %v986
      %v1082 = vpack.c.bf16 %v997, %v994
      %v1083 = vpack.c.bf16 %v1005, %v1002
      %v1084 = vpack.c.bf16 %v1013, %v1010
      %v1093 = vunpack.c.l.b16 %v1077
      %v1094 = vunpack.c.h.b16 %v1077
      %v1095 = vunpack.c.l.b16 %v1078
      %v1096 = vunpack.c.h.b16 %v1078
      %v1097 = vunpack.c.l.b16 %v1079
      %v1098 = vunpack.c.h.b16 %v1079
      %v1099 = vunpack.c.l.b16 %v1080
      %v1100 = vunpack.c.h.b16 %v1080
      %v1101 = vunpack.c.l.b16 %v1081
      %v1102 = vunpack.c.h.b16 %v1081
      %v1103 = vunpack.c.l.b16 %v1082
      %v1104 = vunpack.c.h.b16 %v1082
      %v1105 = vunpack.c.l.b16 %v1083
      %v1106 = vunpack.c.h.b16 %v1083
      %v1107 = vunpack.c.l.b16 %v1084
      %v1108 = vunpack.c.h.b16 %v1084
      %v1109 = vpack.c.b16 %v1093, %v1093
      %v1110 = vpack.c.b16 %v1094, %v1094
      %v1111 = vpack.c.b16 %v1095, %v1095
      %v1112 = vpack.c.b16 %v1096, %v1096
      %v1113 = vpack.c.b16 %v1097, %v1097
      %v1114 = vpack.c.b16 %v1098, %v1098
      %v1115 = vpack.c.b16 %v1099, %v1099
      %v1116 = vpack.c.b16 %v1100, %v1100
      %v1117 = vpack.c.b16 %v1101, %v1101
      %v1118 = vpack.c.b16 %v1102, %v1102
      %v1119 = vpack.c.b16 %v1103, %v1103
      %v1120 = vpack.c.b16 %v1104, %v1104
      %v1121 = vpack.c.b16 %v1105, %v1105
      %v1122 = vpack.c.b16 %v1106, %v1106
      %v1123 = vpack.c.b16 %v1107, %v1107
      %v1124 = vpack.c.b16 %v1108, %v1108
      %1141 = vst [vmem:[%s302] sm:$0xf] %v1109
      %1142 = vst [vmem:[%s302 + $0x4] sm:$0xf] %v1110
      %1143 = vst [vmem:[%s302 + $0x8] sm:$0xf] %v1111
      %1144 = vst [vmem:[%s302 + $0xc] sm:$0xf] %v1112
      %1145 = vst [vmem:[%s302 + $0x10] sm:$0xf] %v1113
      %1146 = vst [vmem:[%s302 + $0x14] sm:$0xf] %v1114
      %1147 = vst [vmem:[%s302 + $0x18] sm:$0xf] %v1115
      %1148 = vst [vmem:[%s302 + $0x1c] sm:$0xf] %v1116
      %1149 = vst [vmem:[%s302 + $0x20] sm:$0xf] %v1117
      %1150 = vst [vmem:[%s302 + $0x24] sm:$0xf] %v1118
      %1151 = vst [vmem:[%s302 + $0x28] sm:$0xf] %v1119
      %1152 = vst [vmem:[%s302 + $0x2c] sm:$0xf] %v1120
      %1153 = vst [vmem:[%s302 + $0x30] sm:$0xf] %v1121
      %1154 = vst [vmem:[%s302 + $0x34] sm:$0xf] %v1122
      %1155 = vst [vmem:[%s302 + $0x38] sm:$0xf] %v1123
      %1156 = vst [vmem:[%s302 + $0x3c] sm:$0xf] %v1124
      %s1157 = smul.u32 8, %s23
      %p1158 = scmp.lt.s32.totalorder %s22, 1
      %s1159 = scalar_select %p1158, %s22, 1
      %p1160 = scmp.lt.s32.totalorder %s1157, 15
      %s1161 = scalar_select %p1160, %s1157, 15
      %s1162 = smul.addr %s1161, 2
      %s1163 = smul.addr %s1159, 32
      %s1164 = sadd.s32 %s1162, %s1163
      %s1165 = smul.addr %s1164, 4
      %s1166 = scalar_lea.vmem %s5, %s1165
      %p1167 = scmp.lt.s32.totalorder %s22, 1
      %s1168 = scalar_select %p1167, %s22, 1
      %p1169 = scmp.lt.s32.totalorder %s23, 1
      %s1170 = scalar_select %p1169, %s23, 1
      %s1171 = smul.addr %s1168, 2
      %s1172 = sadd.s32 %s1170, %s1171
      %s1173 = smul.addr %s1172, 2
      %s1174 = scalar_lea.vmem %s6, %s1173
      // Predicated region
      $region41: #{mobilenet_block.4} parent=39 // pred_check
        %p1175 = pneg %p162
      $region42: #{mobilenet_block.4} parent=39 // pred_check_branch
        %1177 = sbr.rel (%p1175) target = $region44
      $region43: #{mobilenet_block.4} parent=39 // pred_region
        %s1178 = smul.u32 8, %s23
      $region44: #{mobilenet_block.4} parent=39 // pred_fallthru
        _
      // Predicated region
      $region45: #{mobilenet_block.4} parent=39 // pred_check
        %p1179 = pneg %p190
      $region46: #{mobilenet_block.4} parent=39 // pred_check_branch
        %1181 = sbr.rel (%p1179) target = $region48
      $region47: #{mobilenet_block.4} parent=39 // pred_region
        _
      $region48: #{mobilenet_block.4} parent=39 // pred_fallthru
        _
    $region40: #{mobilenet_block.4} parent=5 // pred_fallthru
      _
    %p1182 = scmp.le.s32.totalorder 2, %s13
    // Predicated region
    $region49: #{mobilenet_block.4} parent=5 // pred_check
      %p1183 = pneg %p1182
    $region50: #{mobilenet_block.4} parent=5 // pred_check_branch
      %1185 = sbr.rel (%p1183) target = $region52
    $region51: #{mobilenet_block.4} parent=5 // pred_region
      %s1186 = ssub.s32 %s13, 2
      // Predicated region
      $region53: #{mobilenet_block.4} parent=51 // pred_check
        %p1187 = pneg %p168
      $region54: #{mobilenet_block.4} parent=51 // pred_check_branch
        %1189 = sbr.rel (%p1187) target = $region56
      $region55: #{mobilenet_block.4} parent=51 // pred_region
        %s1190 = smul.u32 8, %s25
        %p1191 = scmp.lt.s32.totalorder %s24, 1
        %s1192 = scalar_select %p1191, %s24, 1
        %p1193 = scmp.lt.s32.totalorder %s1190, 15
        %s1194 = scalar_select %p1193, %s1190, 15
        %s1195 = smul.addr %s1194, 2
        %s1196 = smul.addr %s1192, 32
        %s1197 = sadd.s32 %s1195, %s1196
        %s1198 = smul.addr %s1197, 4
        %s1199 = scalar_lea.vmem %s5, %s1198
      $region56: #{mobilenet_block.4} parent=51 // pred_fallthru
        _
      // Predicated region
      $region57: #{mobilenet_block.4} parent=51 // pred_check
        %p1200 = pneg %p196
      $region58: #{mobilenet_block.4} parent=51 // pred_check_branch
        %1202 = sbr.rel (%p1200) target = $region60
      $region59: #{mobilenet_block.4} parent=51 // pred_region
        %p1203 = scmp.lt.s32.totalorder %s24, 1
        %s1204 = scalar_select %p1203, %s24, 1
        %p1205 = scmp.lt.s32.totalorder %s25, 1
        %s1206 = scalar_select %p1205, %s25, 1
        %s1207 = smul.addr %s1204, 2
        %s1208 = sadd.s32 %s1206, %s1207
        %s1209 = smul.addr %s1208, 2
        %s1210 = scalar_lea.vmem %s6, %s1209
      $region60: #{mobilenet_block.4} parent=51 // pred_fallthru
        _
    $region52: #{mobilenet_block.4} parent=5 // pred_fallthru
      _
  $region6: #{mobilenet_block.4} parent=0 // loop_footer
    %s17 = sadd.s32 1, %s13
  $region7: #{mobilenet_block.4} parent=0 // loop_footer_branch
    %12 = sbr.rel target = $region3
  $region8: #{mobilenet_block.4} parent=0 // loop_exit
    _

</llo_original>
